<compile_context>
chip_gen: v7x
topology: tpu7x:2x2x1
jax: 0.10.0
libtpu: 0.0.40
codegen_flags: <defaults>
</compile_context>

<pallas_src>
import functools

import jax
import jax.numpy as jnp
from jax import lax
from jax.experimental import pallas as pl
from jax.experimental.pallas import tpu as pltpu


def _mod(a, n):
    """a % n for non-negative int32 vectors; bitwise AND for power-of-two n."""
    if n & (n - 1) == 0:
        return jnp.bitwise_and(a, n - 1)
    return a % n  # general (non power-of-two) fallback


def _tensorcores_per_device():
    """Best-effort TensorCore-per-device count (2 on v4/v5p/v7x, else 1)."""
    try:
        kind = jax.devices()[0].device_kind.lower()
    except Exception:
        return 1
    for tag in ("v4", "v5p", "v7"):
        if tag in kind:
            return 2
    return 1


def _res_layer_kernel(x_ref, w1_ref, w2_ref, bias_ref, o_ref, *,
                      C, Cmid, H, W, G):
    f32 = jnp.float32
    HW = H * W
    L = G * HW

    x = x_ref[0].astype(f32)                 # (C, L)       lane-dense
    w1 = w1_ref[...].astype(f32)             # (Cmid, C)    BN scale1 folded in
    w2 = w2_ref[...].astype(f32)             # (C, 9*Cmid)  BN scale2 folded in
    b2 = bias_ref[:, 0:1].astype(f32)        # (C, 1)
    b1 = bias_ref[0:Cmid, 1:2].astype(f32)   # (Cmid, 1)

    # ---- layer 1: 1x1 conv on the MXU + folded-BN bias + LeakyReLU(0.1) ----
    y1 = jnp.dot(w1, x, preferred_element_type=f32) + b1      # (Cmid, L)
    y1 = jnp.maximum(y1, 0.1 * y1)

    # ---- in-kernel edge masks (full-sublane iota -> no XLU broadcasts) ----
    p = lax.broadcasted_iota(jnp.int32, (Cmid, L), 1)
    col = _mod(p, W)            # x position within a row
    rpos = _mod(p, HW)          # flat position within one image (= y*W + x)
    m_l = (col >= 1).astype(f32)              # tap reads x-1 -> kill col 0
    m_r = (col <= W - 2).astype(f32)          # tap reads x+1 -> kill col W-1
    m_t = (rpos >= W).astype(f32)             # tap reads y-1 -> kill row 0
    m_b = (rpos < (H - 1) * W).astype(f32)    # tap reads y+1 -> kill row H-1
    # Every position where the circular roll would cross a row or image seam
    # falls on a masked row/col, so the masks also make the batch-fold safe.

    # ---- layer 2: 3x3 'SAME' conv = 9 lane rolls (XLU) + small MXU dots ----
    acc = jnp.zeros((C, L), f32)
    k = 0
    for dy in (-1, 0, 1):
        for dx in (-1, 0, 1):
            off = dy * W + dx
            t = y1 if off == 0 else pltpu.roll(y1, (-off) % L, axis=1)
            if dx == -1:
                t = t * m_l
            elif dx == 1:
                t = t * m_r
            if dy == -1:
                t = t * m_t
            elif dy == 1:
                t = t * m_b
            # (C, Cmid) x (Cmid, L): tiny matmul on the otherwise-idle MXU.
            acc = acc + jnp.dot(w2[:, k * Cmid:(k + 1) * Cmid], t,
                                preferred_element_type=f32)
            k += 1
    y2 = acc + b2
    y2 = jnp.maximum(y2, 0.1 * y2)            # LeakyReLU(0.1)

    # ---- residual add, single dense (C, L) store ----
    o_ref[0] = (x + y2).astype(o_ref.dtype)


def res_layer_pallas(x_nchw, conv1_w, s1, b1, conv2_w, s2, b2, *,
                     grid_steps=None):
    """x_nchw: (N, C, H, W) float32.
       conv1_w: (Cmid, C, 1, 1), conv2_w: (C, Cmid, 3, 3)  (PyTorch layouts).
       s1/b1: (Cmid,), s2/b2: (C,)  folded eval-mode BatchNorm scale/bias."""
    N, C, H, W = x_nchw.shape
    Cmid = conv1_w.shape[0]
    HW = H * W

    # Grid steps: 1 per TensorCore (fold whole batch on single-TC chips).
    if grid_steps is None:
        grid_steps = max(1, min(N, _tensorcores_per_device()))
    while N % grid_steps:
        grid_steps -= 1
    G = N // grid_steps
    L = G * HW

    # Fold G images into the lane axis: (steps, C, G*HW).
    x = (x_nchw.astype(jnp.float32)
         .reshape(grid_steps, G, C, HW)
         .transpose(0, 2, 1, 3)
         .reshape(grid_steps, C, L))

    # Fold BN scales into the conv weights (wrapper-side, once per call).
    w1s = (s1.reshape(Cmid, 1) * conv1_w.reshape(Cmid, C)).astype(jnp.float32)
    # (C, Cmid, 3, 3) -> (C, 3, 3, Cmid) -> (C, 9*Cmid); col = (ky*3+kx)*Cmid+m
    w2_cols = jnp.transpose(conv2_w, (0, 2, 3, 1)).reshape(C, 9 * Cmid)
    w2s = (s2.reshape(C, 1) * w2_cols).astype(jnp.float32)

    # Pack both biases into one tiny (C, 2) input: col 0 = b2, col 1 = b1.
    bias = jnp.zeros((C, 2), jnp.float32)
    bias = bias.at[:, 0].set(b2.astype(jnp.float32))
    bias = bias.at[:Cmid, 1].set(b1.astype(jnp.float32))

    kernel = functools.partial(_res_layer_kernel, C=C, Cmid=Cmid, H=H, W=W, G=G)

    flops = 2 * N * HW * (C * Cmid + 9 * Cmid * C)
    bytes_accessed = 4 * (2 * x.size + w1s.size + w2s.size + bias.size)

    out = pl.pallas_call(
        kernel,
        out_shape=jax.ShapeDtypeStruct((grid_steps, C, L), jnp.float32),
        grid_spec=pltpu.PrefetchScalarGridSpec(
            num_scalar_prefetch=0,
            grid=(grid_steps,),
            in_specs=[
                pl.BlockSpec((1, C, L), lambda s: (s, 0, 0)),       # x
                pl.BlockSpec((Cmid, C), lambda s: (0, 0)),          # w1 * s1
                pl.BlockSpec((C, 9 * Cmid), lambda s: (0, 0)),      # w2 * s2
                pl.BlockSpec((C, 2), lambda s: (0, 0)),             # b2 | b1
            ],
            out_specs=pl.BlockSpec((1, C, L), lambda s: (s, 0, 0)),
        ),
        compiler_params=pltpu.CompilerParams(
            dimension_semantics=("parallel",)),
        cost_estimate=pl.CostEstimate(
            flops=flops, transcendentals=0, bytes_accessed=bytes_accessed),
    )(x, w1s, w2s, bias)

    return (out.reshape(grid_steps, C, G, HW)
            .transpose(0, 2, 1, 3)
            .reshape(N, C, H, W)).astype(x_nchw.dtype)


# ----------------------------- reference (plain JAX) -----------------------------
def res_layer_ref(x, conv1_w, s1, b1, conv2_w, s2, b2):
    Cmid, C = conv1_w.shape[0], conv1_w.shape[1]
    y = jax.lax.conv_general_dilated(
        x, conv1_w, (1, 1), 'SAME',
        dimension_numbers=('NCHW', 'OIHW', 'NCHW'))
    y = y * s1.reshape(1, Cmid, 1, 1) + b1.reshape(1, Cmid, 1, 1)
    y = jnp.where(y > 0, y, 0.1 * y)
    y = jax.lax.conv_general_dilated(
        y, conv2_w, (1, 1), 'SAME',
        dimension_numbers=('NCHW', 'OIHW', 'NCHW'))
    y = y * s2.reshape(1, C, 1, 1) + b2.reshape(1, C, 1, 1)
    y = jnp.where(y > 0, y, 0.1 * y)
    return x + y


if __name__ == "__main__":
    N, C, H, W = 2, 8, 16, 16          # in_channels=8 -> mid_channels=4
    Cmid = C // 2

    key = jax.random.PRNGKey(0)
    keys = jax.random.split(key, 11)

    x = jax.random.normal(keys[0], (N, C, H, W), jnp.float32)

    # PyTorch conv weight layouts: conv1 (Cmid, C, 1, 1); conv2 (C, Cmid, 3, 3).
    conv1_w = 0.1 * jax.random.normal(keys[1], (Cmid, C, 1, 1), jnp.float32)
    conv2_w = 0.1 * jax.random.normal(keys[2], (C, Cmid, 3, 3), jnp.float32)

    # BatchNorm (eval mode) params -> folded per-channel scale/bias.
    # TODO(synk): training-mode BatchNorm (batch-statistics update) is not
    # implemented; only inference semantics are supported here.
    eps = 1e-5
    g1 = 1.0 + 0.1 * jax.random.normal(keys[3], (Cmid,), jnp.float32)
    be1 = 0.1 * jax.random.normal(keys[4], (Cmid,), jnp.float32)
    m1 = 0.1 * jax.random.normal(keys[5], (Cmid,), jnp.float32)
    v1 = jnp.abs(1.0 + 0.1 * jax.random.normal(keys[6], (Cmid,), jnp.float32))
    g2 = 1.0 + 0.1 * jax.random.normal(keys[7], (C,), jnp.float32)
    be2 = 0.1 * jax.random.normal(keys[8], (C,), jnp.float32)
    m2 = 0.1 * jax.random.normal(keys[9], (C,), jnp.float32)
    v2 = jnp.abs(1.0 + 0.1 * jax.random.normal(keys[10], (C,), jnp.float32))

    s1 = g1 / jnp.sqrt(v1 + eps)
    b1 = be1 - m1 * s1
    s2 = g2 / jnp.sqrt(v2 + eps)
    b2 = be2 - m2 * s2

    out = res_layer_pallas(x, conv1_w, s1, b1, conv2_w, s2, b2)
    out = jax.block_until_ready(out)

    ref = res_layer_ref(x, conv1_w, s1, b1, conv2_w, s2, b2)
    assert out.shape == (N, C, H, W)
    err = float(jnp.max(jnp.abs(out - ref)))
    assert jnp.allclose(out, ref, atol=1e-4, rtol=1e-4), f"max abs err = {err}"

    print("KERNEL_OK")
</pallas_src>

<mosaic_0001>
module attributes {stable_mosaic.version = 11 : i64} {
  func.func @_res_layer_kernel(%arg0: i32, %arg1: memref<1x8x512xf32, #tpu.memory_space<vmem>>, %arg2: memref<4x8xf32, #tpu.memory_space<vmem>>, %arg3: memref<8x36xf32, #tpu.memory_space<vmem>>, %arg4: memref<8x2xf32, #tpu.memory_space<vmem>>, %arg5: memref<1x8x512xf32, #tpu.memory_space<vmem>>) attributes {dimension_semantics = [#tpu.dimension_semantics<parallel>], iteration_bounds = array<i64: 1>, scalar_prefetch = 0 : i64, scratch_operands = 0 : i64, tpu.core_type = #tpu.core_type<tc>, window_params = [{transform_indices = @transform_0, window_bounds = array<i64: 1, 8, 512>}, {pipeline_mode = #tpu.pipeline_mode<synchronous>, transform_indices = @transform_1, window_bounds = array<i64: 4, 8>}, {pipeline_mode = #tpu.pipeline_mode<synchronous>, transform_indices = @transform_2, window_bounds = array<i64: 8, 36>}, {pipeline_mode = #tpu.pipeline_mode<synchronous>, transform_indices = @transform_3, window_bounds = array<i64: 8, 2>}, {transform_indices = @transform_4, window_bounds = array<i64: 1, 8, 512>}]} {
    %c0 = arith.constant 0 : index
    %c0_0 = arith.constant 0 : index
    %c0_1 = arith.constant 0 : index
    %0 = vector.load %arg1[%c0, %c0_0, %c0_1] : memref<1x8x512xf32, #tpu.memory_space<vmem>>, vector<1x8x512xf32>
    %1 = vector.shape_cast %0 : vector<1x8x512xf32> to vector<8x512xf32>
    %c0_2 = arith.constant 0 : index
    %c0_3 = arith.constant 0 : index
    %2 = vector.load %arg2[%c0_2, %c0_3] : memref<4x8xf32, #tpu.memory_space<vmem>>, vector<4x8xf32>
    %c0_4 = arith.constant 0 : index
    %c0_5 = arith.constant 0 : index
    %3 = vector.load %arg3[%c0_4, %c0_5] : memref<8x36xf32, #tpu.memory_space<vmem>>, vector<8x36xf32>
    %c0_6 = arith.constant 0 : index
    %c0_7 = arith.constant 0 : index
    %4 = vector.load %arg4[%c0_6, %c0_7] : memref<8x2xf32, #tpu.memory_space<vmem>>, vector<8x1xf32>
    %c0_8 = arith.constant 0 : index
    %c1 = arith.constant 1 : index
    %5 = vector.load %arg4[%c0_8, %c1] : memref<8x2xf32, #tpu.memory_space<vmem>>, vector<4x1xf32>
    %cst = arith.constant dense<0.000000e+00> : vector<4x512xf32>
    %6 = tpu.matmul %2, %1, %cst {dimension_numbers = #tpu.dot_dimension_numbers<[1], [0], [0], [1], [0, 0, 1, 1], [], []>} : vector<4x8xf32>, vector<8x512xf32>, vector<4x512xf32> -> vector<4x512xf32>
    %7 = vector.broadcast %5 : vector<4x1xf32> to vector<4x512xf32>
    %8 = arith.addf %6, %7 : vector<4x512xf32>
    %cst_9 = arith.constant 1.000000e-01 : f32
    %9 = vector.broadcast %cst_9 : f32 to vector<4x512xf32>
    %10 = arith.mulf %9, %8 : vector<4x512xf32>
    %11 = arith.maximumf %8, %10 : vector<4x512xf32>
    %12 = tpu.iota {dimensions = array<i32: 1>} : vector<4x512xi32>
    %c15_i32 = arith.constant 15 : i32
    %13 = vector.broadcast %c15_i32 : i32 to vector<4x512xi32>
    %14 = arith.andi %12, %13 : vector<4x512xi32>
    %c255_i32 = arith.constant 255 : i32
    %15 = vector.broadcast %c255_i32 : i32 to vector<4x512xi32>
    %16 = arith.andi %12, %15 : vector<4x512xi32>
    %c1_i32 = arith.constant 1 : i32
    %17 = vector.broadcast %c1_i32 : i32 to vector<4x512xi32>
    %18 = arith.cmpi sge, %14, %17 : vector<4x512xi32>
    %19 = arith.extui %18 : vector<4x512xi1> to vector<4x512xi32>
    %20 = arith.sitofp %19 : vector<4x512xi32> to vector<4x512xf32>
    %c14_i32 = arith.constant 14 : i32
    %21 = vector.broadcast %c14_i32 : i32 to vector<4x512xi32>
    %22 = arith.cmpi sle, %14, %21 : vector<4x512xi32>
    %23 = arith.extui %22 : vector<4x512xi1> to vector<4x512xi32>
    %24 = arith.sitofp %23 : vector<4x512xi32> to vector<4x512xf32>
    %c16_i32 = arith.constant 16 : i32
    %25 = vector.broadcast %c16_i32 : i32 to vector<4x512xi32>
    %26 = arith.cmpi sge, %16, %25 : vector<4x512xi32>
    %27 = arith.extui %26 : vector<4x512xi1> to vector<4x512xi32>
    %28 = arith.sitofp %27 : vector<4x512xi32> to vector<4x512xf32>
    %c240_i32 = arith.constant 240 : i32
    %29 = vector.broadcast %c240_i32 : i32 to vector<4x512xi32>
    %30 = arith.cmpi slt, %16, %29 : vector<4x512xi32>
    %31 = arith.extui %30 : vector<4x512xi1> to vector<4x512xi32>
    %32 = arith.sitofp %31 : vector<4x512xi32> to vector<4x512xf32>
    %cst_10 = arith.constant 0.000000e+00 : f32
    %33 = vector.broadcast %cst_10 : f32 to vector<8x512xf32>
    %c17_i32 = arith.constant 17 : i32
    %34 = tpu.dynamic_rotate %11 by %c17_i32 dim 1 : vector<4x512xf32>, i32 -> vector<4x512xf32>
    %35 = arith.mulf %34, %20 : vector<4x512xf32>
    %36 = arith.mulf %35, %28 : vector<4x512xf32>
    %37 = vector.extract_strided_slice %3 {offsets = [0, 0], sizes = [8, 4], strides = [1, 1]} : vector<8x36xf32> to vector<8x4xf32>
    %cst_11 = arith.constant dense<0.000000e+00> : vector<8x512xf32>
    %38 = tpu.matmul %37, %36, %cst_11 {dimension_numbers = #tpu.dot_dimension_numbers<[1], [0], [0], [1], [0, 0, 1, 1], [], []>} : vector<8x4xf32>, vector<4x512xf32>, vector<8x512xf32> -> vector<8x512xf32>
    %39 = arith.addf %33, %38 : vector<8x512xf32>
    %c16_i32_12 = arith.constant 16 : i32
    %40 = tpu.dynamic_rotate %11 by %c16_i32_12 dim 1 : vector<4x512xf32>, i32 -> vector<4x512xf32>
    %41 = arith.mulf %40, %28 : vector<4x512xf32>
    %42 = vector.extract_strided_slice %3 {offsets = [0, 4], sizes = [8, 4], strides = [1, 1]} : vector<8x36xf32> to vector<8x4xf32>
    %cst_13 = arith.constant dense<0.000000e+00> : vector<8x512xf32>
    %43 = tpu.matmul %42, %41, %cst_13 {dimension_numbers = #tpu.dot_dimension_numbers<[1], [0], [0], [1], [0, 0, 1, 1], [], []>} : vector<8x4xf32>, vector<4x512xf32>, vector<8x512xf32> -> vector<8x512xf32>
    %44 = arith.addf %39, %43 : vector<8x512xf32>
    %c15_i32_14 = arith.constant 15 : i32
    %45 = tpu.dynamic_rotate %11 by %c15_i32_14 dim 1 : vector<4x512xf32>, i32 -> vector<4x512xf32>
    %46 = arith.mulf %45, %24 : vector<4x512xf32>
    %47 = arith.mulf %46, %28 : vector<4x512xf32>
    %48 = vector.extract_strided_slice %3 {offsets = [0, 8], sizes = [8, 4], strides = [1, 1]} : vector<8x36xf32> to vector<8x4xf32>
    %cst_15 = arith.constant dense<0.000000e+00> : vector<8x512xf32>
    %49 = tpu.matmul %48, %47, %cst_15 {dimension_numbers = #tpu.dot_dimension_numbers<[1], [0], [0], [1], [0, 0, 1, 1], [], []>} : vector<8x4xf32>, vector<4x512xf32>, vector<8x512xf32> -> vector<8x512xf32>
    %50 = arith.addf %44, %49 : vector<8x512xf32>
    %c1_i32_16 = arith.constant 1 : i32
    %51 = tpu.dynamic_rotate %11 by %c1_i32_16 dim 1 : vector<4x512xf32>, i32 -> vector<4x512xf32>
    %52 = arith.mulf %51, %20 : vector<4x512xf32>
    %53 = vector.extract_strided_slice %3 {offsets = [0, 12], sizes = [8, 4], strides = [1, 1]} : vector<8x36xf32> to vector<8x4xf32>
    %cst_17 = arith.constant dense<0.000000e+00> : vector<8x512xf32>
    %54 = tpu.matmul %53, %52, %cst_17 {dimension_numbers = #tpu.dot_dimension_numbers<[1], [0], [0], [1], [0, 0, 1, 1], [], []>} : vector<8x4xf32>, vector<4x512xf32>, vector<8x512xf32> -> vector<8x512xf32>
    %55 = arith.addf %50, %54 : vector<8x512xf32>
    %56 = vector.extract_strided_slice %3 {offsets = [0, 16], sizes = [8, 4], strides = [1, 1]} : vector<8x36xf32> to vector<8x4xf32>
    %cst_18 = arith.constant dense<0.000000e+00> : vector<8x512xf32>
    %57 = tpu.matmul %56, %11, %cst_18 {dimension_numbers = #tpu.dot_dimension_numbers<[1], [0], [0], [1], [0, 0, 1, 1], [], []>} : vector<8x4xf32>, vector<4x512xf32>, vector<8x512xf32> -> vector<8x512xf32>
    %58 = arith.addf %55, %57 : vector<8x512xf32>
    %c511_i32 = arith.constant 511 : i32
    %59 = tpu.dynamic_rotate %11 by %c511_i32 dim 1 : vector<4x512xf32>, i32 -> vector<4x512xf32>
    %60 = arith.mulf %59, %24 : vector<4x512xf32>
    %61 = vector.extract_strided_slice %3 {offsets = [0, 20], sizes = [8, 4], strides = [1, 1]} : vector<8x36xf32> to vector<8x4xf32>
    %cst_19 = arith.constant dense<0.000000e+00> : vector<8x512xf32>
    %62 = tpu.matmul %61, %60, %cst_19 {dimension_numbers = #tpu.dot_dimension_numbers<[1], [0], [0], [1], [0, 0, 1, 1], [], []>} : vector<8x4xf32>, vector<4x512xf32>, vector<8x512xf32> -> vector<8x512xf32>
    %63 = arith.addf %58, %62 : vector<8x512xf32>
    %c497_i32 = arith.constant 497 : i32
    %64 = tpu.dynamic_rotate %11 by %c497_i32 dim 1 : vector<4x512xf32>, i32 -> vector<4x512xf32>
    %65 = arith.mulf %64, %20 : vector<4x512xf32>
    %66 = arith.mulf %65, %32 : vector<4x512xf32>
    %67 = vector.extract_strided_slice %3 {offsets = [0, 24], sizes = [8, 4], strides = [1, 1]} : vector<8x36xf32> to vector<8x4xf32>
    %cst_20 = arith.constant dense<0.000000e+00> : vector<8x512xf32>
    %68 = tpu.matmul %67, %66, %cst_20 {dimension_numbers = #tpu.dot_dimension_numbers<[1], [0], [0], [1], [0, 0, 1, 1], [], []>} : vector<8x4xf32>, vector<4x512xf32>, vector<8x512xf32> -> vector<8x512xf32>
    %69 = arith.addf %63, %68 : vector<8x512xf32>
    %c496_i32 = arith.constant 496 : i32
    %70 = tpu.dynamic_rotate %11 by %c496_i32 dim 1 : vector<4x512xf32>, i32 -> vector<4x512xf32>
    %71 = arith.mulf %70, %32 : vector<4x512xf32>
    %72 = vector.extract_strided_slice %3 {offsets = [0, 28], sizes = [8, 4], strides = [1, 1]} : vector<8x36xf32> to vector<8x4xf32>
    %cst_21 = arith.constant dense<0.000000e+00> : vector<8x512xf32>
    %73 = tpu.matmul %72, %71, %cst_21 {dimension_numbers = #tpu.dot_dimension_numbers<[1], [0], [0], [1], [0, 0, 1, 1], [], []>} : vector<8x4xf32>, vector<4x512xf32>, vector<8x512xf32> -> vector<8x512xf32>
    %74 = arith.addf %69, %73 : vector<8x512xf32>
    %c495_i32 = arith.constant 495 : i32
    %75 = tpu.dynamic_rotate %11 by %c495_i32 dim 1 : vector<4x512xf32>, i32 -> vector<4x512xf32>
    %76 = arith.mulf %75, %24 : vector<4x512xf32>
    %77 = arith.mulf %76, %32 : vector<4x512xf32>
    %78 = vector.extract_strided_slice %3 {offsets = [0, 32], sizes = [8, 4], strides = [1, 1]} : vector<8x36xf32> to vector<8x4xf32>
    %cst_22 = arith.constant dense<0.000000e+00> : vector<8x512xf32>
    %79 = tpu.matmul %78, %77, %cst_22 {dimension_numbers = #tpu.dot_dimension_numbers<[1], [0], [0], [1], [0, 0, 1, 1], [], []>} : vector<8x4xf32>, vector<4x512xf32>, vector<8x512xf32> -> vector<8x512xf32>
    %80 = arith.addf %74, %79 : vector<8x512xf32>
    %81 = vector.broadcast %4 : vector<8x1xf32> to vector<8x512xf32>
    %82 = arith.addf %80, %81 : vector<8x512xf32>
    %cst_23 = arith.constant 1.000000e-01 : f32
    %83 = vector.broadcast %cst_23 : f32 to vector<8x512xf32>
    %84 = arith.mulf %83, %82 : vector<8x512xf32>
    %85 = arith.maximumf %82, %84 : vector<8x512xf32>
    %86 = arith.addf %1, %85 : vector<8x512xf32>
    %c0_24 = arith.constant 0 : index
    %c0_25 = arith.constant 0 : index
    %c0_26 = arith.constant 0 : index
    %87 = vector.load %arg5[%c0_24, %c0_25, %c0_26] : memref<1x8x512xf32, #tpu.memory_space<vmem>>, vector<1x8x512xf32>
    %88 = vector.shape_cast %87 : vector<1x8x512xf32> to vector<8x512xf32>
    %89 = vector.shape_cast %86 : vector<8x512xf32> to vector<1x8x512xf32>
    tpu.vector_store %arg5[%c0_24, %c0_25, %c0_26], %89 {strides = array<i32>} : memref<1x8x512xf32, #tpu.memory_space<vmem>>, vector<1x8x512xf32>,
    return
  }
  func.func @transform_0(%arg0: i32) -> (i32, i32, i32) {
    %c0_i32 = arith.constant 0 : i32
    %c0_i32_0 = arith.constant 0 : i32
    %c0_i32_1 = arith.constant 0 : i32
    return %arg0, %c0_i32, %c0_i32_0 : i32, i32, i32
  }
  func.func @transform_1(%arg0: i32) -> (i32, i32) {
    %c0_i32 = arith.constant 0 : i32
    %c0_i32_0 = arith.constant 0 : i32
    %c0_i32_1 = arith.constant 0 : i32
    return %c0_i32, %c0_i32_0 : i32, i32
  }
  func.func @transform_2(%arg0: i32) -> (i32, i32) {
    %c0_i32 = arith.constant 0 : i32
    %c0_i32_0 = arith.constant 0 : i32
    %c0_i32_1 = arith.constant 0 : i32
    return %c0_i32, %c0_i32_0 : i32, i32
  }
  func.func @transform_3(%arg0: i32) -> (i32, i32) {
    %c0_i32 = arith.constant 0 : i32
    %c0_i32_0 = arith.constant 0 : i32
    %c0_i32_1 = arith.constant 0 : i32
    return %c0_i32, %c0_i32_0 : i32, i32
  }
  func.func @transform_4(%arg0: i32) -> (i32, i32, i32) {
    %c0_i32 = arith.constant 0 : i32
    %c0_i32_0 = arith.constant 0 : i32
    %c0_i32_1 = arith.constant 0 : i32
    return %arg0, %c0_i32, %c0_i32_0 : i32, i32, i32
  }
}

</mosaic_0001>

<llo_original>
// kernel: tpu_custom_call.1
$region0: #{tpu_custom_call.1}
  #allocation0 [shape = 'u32[]', space=smem, size = 0x4, offset = 0x4, fixed_abs, tag = 'smem constant byte address 0x4 - core index']
  #allocation1 [shape = 'u32[144,128]{1,0:T(1,128)}', space=vmem, size = 0x12000, scoped, tag = 'internal scratch']
  %s0 = inlined_call_operand.hbm [shape: f32[1,8,512], index: 0, kind: input, shape index: {}]
  %s1 = inlined_call_operand.vmem [shape: f32[4,8], index: 1, kind: input, shape index: {}]
  %s2 = inlined_call_operand.vmem [shape: f32[8,36], index: 2, kind: input, shape index: {}]
  %s3 = inlined_call_operand.vmem [shape: f32[8,2], index: 3, kind: input, shape index: {}]
  %s4 = inlined_call_operand.hbm [shape: f32[1,8,512], index: 4, kind: output, shape index: {}]
  %s5 = sld [smem:[#allocation0]]
  $region30: #{tpu_custom_call.1} parent=0
    _
  %s7 = ssub.s32 1, %s5
  %s8 = scalar_select 0, %s7, %s5
  $region1: #{tpu_custom_call.1} parent=0
    #allocation2 [shape = 'u8[16384]{0}', space=vmem, size = 0x4000, scoped, tag = 'input window, operand 0, single buffered']
    #allocation3 [shape = 's32[1]{0}', space=sflag, size = 0x4, scoped, tag = 'scoped memory for tpu_custom_call.1']
    #allocation4 [shape = 's32[1]{0}', space=sflag, size = 0x4, scoped, tag = 'scoped memory for tpu_custom_call.1']
    #allocation5 [shape = 'u8[16384]{0}', space=vmem, size = 0x4000, scoped, tag = 'output window, operand 0, single buffered']
    %9 = vsyncpa [#allocation3], 0
    %10 = vsyncpa [#allocation4], 0
    // Predicated region
    $region2: #{tpu_custom_call.1} parent=1 // pred_check
      _
    $region3: #{tpu_custom_call.1} parent=1 // pred_check_branch
      %12 = sbr.rel (0) target = $region5
    $region4: #{tpu_custom_call.1} parent=1 // pred_region
      %s14 = ssub.s32 512, 512
      %15 = vsyncadd [#allocation3], %s14
      %s17 = sshll.u32 [#allocation2], 4
      %s18 = int_to_ptr.vmem [resolvable:$true] %s17
      %20 = dma.hbm_to_vmem [thread:$0]  %s0, 512, %s18, [#allocation3]
    $region5: #{tpu_custom_call.1} parent=1 // pred_fallthru
      _
    // Predicated region
    $region6: #{tpu_custom_call.1} parent=1 // pred_check
      _
    $region7: #{tpu_custom_call.1} parent=1 // pred_check_branch
      %22 = sbr.rel (0) target = $region9
    $region8: #{tpu_custom_call.1} parent=1 // pred_region
      _
    $region9: #{tpu_custom_call.1} parent=1 // pred_fallthru
      _
    // Predicated region
    $region10: #{tpu_custom_call.1} parent=1 // pred_check
      _
    $region11: #{tpu_custom_call.1} parent=1 // pred_check_branch
      %24 = sbr.rel (0) target = $region13
    $region12: #{tpu_custom_call.1} parent=1 // pred_region
      _
    $region13: #{tpu_custom_call.1} parent=1 // pred_fallthru
      _
    // Predicated region
    $region14: #{tpu_custom_call.1} parent=1 // pred_check
      _
    $region15: #{tpu_custom_call.1} parent=1 // pred_check_branch
      %26 = sbr.rel (0) target = $region17
    $region16: #{tpu_custom_call.1} parent=1 // pred_region
      _
    $region17: #{tpu_custom_call.1} parent=1 // pred_fallthru
      _
    // Predicated region
    $region18: #{tpu_custom_call.1} parent=1 // pred_check
      _
    $region19: #{tpu_custom_call.1} parent=1 // pred_check_branch
      %28 = sbr.rel (0) target = $region21
    $region20: #{tpu_custom_call.1} parent=1 // pred_region
      %29 = dma.done [#allocation3], 512
    $region21: #{tpu_custom_call.1} parent=1 // pred_fallthru
      _
    %v30 = vld [vmem:[#allocation2] sm:$0xff]
    %v31 = vld [vmem:[#allocation2 + $0x8] sm:$0xff]
    %v32 = vld [vmem:[#allocation2 + $0x10] sm:$0xff]
    %v33 = vld [vmem:[#allocation2 + $0x18] sm:$0xff]
    %v34 = vld [vmem:[%s1] sm:$0xf]
    %v35 = vld [vmem:[%s2] sm:$0xff]
    %v36 = vld [vmem:[%s3] sm:$0xff]
    %v37 = vld [vmem:[%s3] sm:$0xf]
    %39 = vset.pattern.permute.xlu0 1
    %40 = vperm.xlu0 %39, %v37
    %v41 = vpop.permute.xlu0 %40
    %vm43 = vcmask 64512
    %v45 = vsel %vm43, %v34, 0
    %47 = vmatprep.subr.mxu0 %v31
    %48 = vmatpush1.msra.mxu0 %v30
    %49 = vmatprep.subr.mxu0 0.0
    %50 = vmatpush1.msra.mxu0 0.0
    %51 = vmatprep.subr.mxu0 0.0
    %52 = vmatpush1.msra.mxu0 0.0
    %53 = vmatprep.subr.mxu0 0.0
    %54 = vmatpush1.msra.mxu0 0.0
    %55 = vmatprep.subr.mxu0 0.0
    %56 = vmatpush1.msra.mxu0 0.0
    %57 = vmatprep.subr.mxu0 0.0
    %58 = vmatpush1.msra.mxu0 0.0
    %59 = vmatprep.subr.mxu0 0.0
    %60 = vmatpush1.msra.mxu0 0.0
    %61 = vmatprep.subr.mxu0 0.0
    %62 = vmatpush1.msra.mxu0 0.0
    %63 = vmatprep.subr.mxu0 0.0
    %64 = vmatpush1.msra.mxu0 0.0
    %65 = vmatprep.subr.mxu0 0.0
    %66 = vmatpush1.msra.mxu0 0.0
    %67 = vmatprep.subr.mxu0 0.0
    %68 = vmatpush1.msra.mxu0 0.0
    %69 = vmatprep.subr.mxu0 0.0
    %70 = vmatpush1.msra.mxu0 0.0
    %71 = vmatprep.subr.mxu0 0.0
    %72 = vmatpush1.msra.mxu0 0.0
    %73 = vmatprep.subr.mxu0 0.0
    %74 = vmatpush1.msra.mxu0 0.0
    %75 = vmatprep.subr.mxu0 0.0
    %76 = vmatpush1.msra.mxu0 0.0
    %77 = vmatprep.subr.mxu0 0.0
    %78 = vmatpush1.msra.mxu0 0.0
    %79 = vmatprep.subr.mxu0 0.0
    %80 = vmatpush1.msra.mxu0 0.0
    %81 = vmatprep.subr.mxu0 0.0
    %82 = vmatpush1.msra.mxu0 0.0
    %83 = vmatprep.subr.mxu0 0.0
    %84 = vmatpush1.msra.mxu0 0.0
    %85 = vmatprep.subr.mxu0 0.0
    %86 = vmatpush1.msra.mxu0 0.0
    %87 = vmatprep.subr.mxu0 0.0
    %88 = vmatpush1.msra.mxu0 0.0
    %89 = vmatprep.subr.mxu0 0.0
    %90 = vmatpush1.msra.mxu0 0.0
    %91 = vmatprep.subr.mxu0 0.0
    %92 = vmatpush1.msra.mxu0 0.0
    %93 = vmatprep.subr.mxu0 0.0
    %94 = vmatpush1.msra.mxu0 0.0
    %95 = vmatprep.subr.mxu0 0.0
    %96 = vmatpush1.msra.mxu0 0.0
    %97 = vmatprep.subr.mxu0 0.0
    %98 = vmatpush1.msra.mxu0 0.0
    %99 = vmatprep.subr.mxu0 0.0
    %100 = vmatpush1.msra.mxu0 0.0
    %101 = vmatprep.subr.mxu0 0.0
    %102 = vmatpush1.msra.mxu0 0.0
    %103 = vmatprep.subr.mxu0 0.0
    %104 = vmatpush1.msra.mxu0 0.0
    %105 = vmatprep.subr.mxu0 0.0
    %106 = vmatpush1.msra.mxu0 0.0
    %107 = vmatprep.subr.mxu0 0.0
    %108 = vmatpush1.msra.mxu0 0.0
    %109 = vmatprep.subr.mxu0 0.0
    %110 = vmatpush1.msra.mxu0 0.0
    %111 = vmatprep.mubr.f32.mxu0 0.0
    %112 = vmatmul.mubr.f32.gmra.mrb[0].mxu0 %v45
    %v113 = vpop.f32.mrb[0].mxu0
    %v114 = vadd.f32 %v41, %v113
    %v115 = vpop.f32.mrb[0].mxu0
    %v116 = vadd.f32 %v41, %v115
    %117 = vdwg.mxu0
    %118 = vmatprep.subr.mxu0 %v33
    %119 = vmatpush1.msra.mxu0 %v32
    %120 = vmatprep.subr.mxu0 0.0
    %121 = vmatpush1.msra.mxu0 0.0
    %122 = vmatprep.subr.mxu0 0.0
    %123 = vmatpush1.msra.mxu0 0.0
    %124 = vmatprep.subr.mxu0 0.0
    %125 = vmatpush1.msra.mxu0 0.0
    %126 = vmatprep.subr.mxu0 0.0
    %127 = vmatpush1.msra.mxu0 0.0
    %128 = vmatprep.subr.mxu0 0.0
    %129 = vmatpush1.msra.mxu0 0.0
    %130 = vmatprep.subr.mxu0 0.0
    %131 = vmatpush1.msra.mxu0 0.0
    %132 = vmatprep.subr.mxu0 0.0
    %133 = vmatpush1.msra.mxu0 0.0
    %134 = vmatprep.subr.mxu0 0.0
    %135 = vmatpush1.msra.mxu0 0.0
    %136 = vmatprep.subr.mxu0 0.0
    %137 = vmatpush1.msra.mxu0 0.0
    %138 = vmatprep.subr.mxu0 0.0
    %139 = vmatpush1.msra.mxu0 0.0
    %140 = vmatprep.subr.mxu0 0.0
    %141 = vmatpush1.msra.mxu0 0.0
    %142 = vmatprep.subr.mxu0 0.0
    %143 = vmatpush1.msra.mxu0 0.0
    %144 = vmatprep.subr.mxu0 0.0
    %145 = vmatpush1.msra.mxu0 0.0
    %146 = vmatprep.subr.mxu0 0.0
    %147 = vmatpush1.msra.mxu0 0.0
    %148 = vmatprep.subr.mxu0 0.0
    %149 = vmatpush1.msra.mxu0 0.0
    %150 = vmatprep.subr.mxu0 0.0
    %151 = vmatpush1.msra.mxu0 0.0
    %152 = vmatprep.subr.mxu0 0.0
    %153 = vmatpush1.msra.mxu0 0.0
    %154 = vmatprep.subr.mxu0 0.0
    %155 = vmatpush1.msra.mxu0 0.0
    %156 = vmatprep.subr.mxu0 0.0
    %157 = vmatpush1.msra.mxu0 0.0
    %158 = vmatprep.subr.mxu0 0.0
    %159 = vmatpush1.msra.mxu0 0.0
    %160 = vmatprep.subr.mxu0 0.0
    %161 = vmatpush1.msra.mxu0 0.0
    %162 = vmatprep.subr.mxu0 0.0
    %163 = vmatpush1.msra.mxu0 0.0
    %164 = vmatprep.subr.mxu0 0.0
    %165 = vmatpush1.msra.mxu0 0.0
    %166 = vmatprep.subr.mxu0 0.0
    %167 = vmatpush1.msra.mxu0 0.0
    %168 = vmatprep.subr.mxu0 0.0
    %169 = vmatpush1.msra.mxu0 0.0
    %170 = vmatprep.subr.mxu0 0.0
    %171 = vmatpush1.msra.mxu0 0.0
    %172 = vmatprep.subr.mxu0 0.0
    %173 = vmatpush1.msra.mxu0 0.0
    %174 = vmatprep.subr.mxu0 0.0
    %175 = vmatpush1.msra.mxu0 0.0
    %176 = vmatprep.subr.mxu0 0.0
    %177 = vmatpush1.msra.mxu0 0.0
    %178 = vmatprep.subr.mxu0 0.0
    %179 = vmatpush1.msra.mxu0 0.0
    %180 = vmatprep.subr.mxu0 0.0
    %181 = vmatpush1.msra.mxu0 0.0
    %182 = vmatprep.mubr.f32.mxu0 0.0
    %183 = vmatmul.mubr.f32.gmra.mrb[0].mxu0 %v45
    %v184 = vpop.f32.mrb[0].mxu0
    %v185 = vadd.f32 %v41, %v184
    %v186 = vpop.f32.mrb[0].mxu0
    %v187 = vadd.f32 %v41, %v186
    %188 = vdwg.mxu0
    %v189 = vmul.f32 %v114, 0.1
    %v190 = vmul.f32 %v116, 0.1
    %v191 = vmul.f32 %v185, 0.1
    %v192 = vmul.f32 %v187, 0.1
    %v193 = vmax.f32 %v114, %v189
    %v194 = vmax.f32 %v116, %v190
    %v195 = vmax.f32 %v185, %v191
    %v196 = vmax.f32 %v187, %v192
    %v197 = vlaneseq
    %v198 = vand.u32 %v197, 127
    %v199 = vadd.s32 %v198, 128
    %v200 = vadd.s32 %v198, 256
    %v201 = vadd.s32 %v198, 384
    %v202 = vand.u32 %v198, 15
    %v203 = vand.u32 %v199, 15
    %v204 = vand.u32 %v200, 15
    %v205 = vand.u32 %v201, 15
    %v206 = vand.u32 %v198, 255
    %v207 = vand.u32 %v199, 255
    %v208 = vand.u32 %v200, 255
    %v209 = vand.u32 %v201, 255
    %vm210 = vcmp.ge.s32.totalorder %v202, 1
    %vm211 = vcmp.ge.s32.totalorder %v203, 1
    %vm212 = vcmp.ge.s32.totalorder %v204, 1
    %vm213 = vcmp.ge.s32.totalorder %v205, 1
    %v214 = vsel %vm210, 1, 0
    %v215 = vsel %vm211, 1, 0
    %v216 = vsel %vm212, 1, 0
    %v217 = vsel %vm213, 1, 0
    %v218 = vcvt.s32.f32 %v214
    %v219 = vcvt.s32.f32 %v215
    %v220 = vcvt.s32.f32 %v216
    %v221 = vcvt.s32.f32 %v217
    %vm222 = vcmp.le.s32.totalorder %v202, 14
    %vm223 = vcmp.le.s32.totalorder %v203, 14
    %vm224 = vcmp.le.s32.totalorder %v204, 14
    %vm225 = vcmp.le.s32.totalorder %v205, 14
    %v226 = vsel %vm222, 1, 0
    %v227 = vsel %vm223, 1, 0
    %v228 = vsel %vm224, 1, 0
    %v229 = vsel %vm225, 1, 0
    %v230 = vcvt.s32.f32 %v226
    %v231 = vcvt.s32.f32 %v227
    %v232 = vcvt.s32.f32 %v228
    %v233 = vcvt.s32.f32 %v229
    %vm234 = vcmp.ge.s32.totalorder %v206, 16
    %vm235 = vcmp.ge.s32.totalorder %v207, 16
    %vm236 = vcmp.ge.s32.totalorder %v208, 16
    %vm237 = vcmp.ge.s32.totalorder %v209, 16
    %v238 = vsel %vm234, 1, 0
    %v239 = vsel %vm235, 1, 0
    %v240 = vsel %vm236, 1, 0
    %v241 = vsel %vm237, 1, 0
    %v242 = vcvt.s32.f32 %v238
    %v243 = vcvt.s32.f32 %v239
    %v244 = vcvt.s32.f32 %v240
    %v245 = vcvt.s32.f32 %v241
    %vm246 = vcmp.lt.s32.totalorder %v206, 240
    %vm247 = vcmp.lt.s32.totalorder %v207, 240
    %vm248 = vcmp.lt.s32.totalorder %v208, 240
    %vm249 = vcmp.lt.s32.totalorder %v209, 240
    %v250 = vsel %vm246, 1, 0
    %v251 = vsel %vm247, 1, 0
    %v252 = vsel %vm248, 1, 0
    %v253 = vsel %vm249, 1, 0
    %v254 = vcvt.s32.f32 %v250
    %v255 = vcvt.s32.f32 %v251
    %v256 = vcvt.s32.f32 %v252
    %v257 = vcvt.s32.f32 %v253
    %258 = vrot.lane.b32.xlu0 %v193, 17
    %v259 = vpop.permute.xlu0 %258
    %260 = vrot.lane.b32.xlu0 %v194, 17
    %v261 = vpop.permute.xlu0 %260
    %262 = vrot.lane.b32.xlu0 %v195, 17
    %v263 = vpop.permute.xlu0 %262
    %264 = vrot.lane.b32.xlu0 %v196, 17
    %v265 = vpop.permute.xlu0 %264
    %vm266 = vcmp.lt.s32.totalorder %v198, 17
    %v267 = vsel %vm266, %v263, %v265
    %v268 = vsel %vm266, %v261, %v263
    %v269 = vsel %vm266, %v259, %v261
    %v270 = vsel %vm266, %v265, %v259
    %v271 = vmul.f32 %v270, %v218
    %v272 = vmul.f32 %v269, %v219
    %v273 = vmul.f32 %v268, %v220
    %v274 = vmul.f32 %v267, %v221
    %v275 = vmul.f32 %v271, %v242
    %v276 = vmul.f32 %v272, %v243
    %v277 = vmul.f32 %v273, %v244
    %v278 = vmul.f32 %v274, %v245
    %279 = vrot.lane.b32.xlu0 %v193, 16
    %v280 = vpop.permute.xlu0 %279
    %281 = vrot.lane.b32.xlu0 %v194, 16
    %v282 = vpop.permute.xlu0 %281
    %283 = vrot.lane.b32.xlu0 %v195, 16
    %v284 = vpop.permute.xlu0 %283
    %285 = vrot.lane.b32.xlu0 %v196, 16
    %v286 = vpop.permute.xlu0 %285
    %vm287 = vcmp.lt.s32.totalorder %v198, 16
    %v288 = vsel %vm287, %v284, %v286
    %v289 = vsel %vm287, %v282, %v284
    %v290 = vsel %vm287, %v280, %v282
    %v291 = vsel %vm287, %v286, %v280
    %v292 = vmul.f32 %v291, %v242
    %v293 = vmul.f32 %v290, %v243
    %v294 = vmul.f32 %v289, %v244
    %v295 = vmul.f32 %v288, %v245
    %297 = vrot.lane.b32.xlu0 %v35, 124
    %v298 = vpop.permute.xlu0 %297
    %vm299 = vcmask 31744
    %v300 = vsel %vm299, %v298, 0
    %vm302 = vcmask 1043456
    %v304 = vsel %vm302, %v292, 0
    %v307 = vsel %vm302, %v293, 0
    %v310 = vsel %vm302, %v294, 0
    %v313 = vsel %vm302, %v295, 0
    %315 = vmatprep.subr.mxu0 %v307
    %316 = vmatpush1.msra.mxu0 %v304
    %317 = vmatprep.subr.mxu0 0.0
    %318 = vmatpush1.msra.mxu0 0.0
    %319 = vmatprep.subr.mxu0 0.0
    %320 = vmatpush1.msra.mxu0 0.0
    %321 = vmatprep.subr.mxu0 0.0
    %322 = vmatpush1.msra.mxu0 0.0
    %323 = vmatprep.subr.mxu0 0.0
    %324 = vmatpush1.msra.mxu0 0.0
    %325 = vmatprep.subr.mxu0 0.0
    %326 = vmatpush1.msra.mxu0 0.0
    %327 = vmatprep.subr.mxu0 0.0
    %328 = vmatpush1.msra.mxu0 0.0
    %329 = vmatprep.subr.mxu0 0.0
    %330 = vmatpush1.msra.mxu0 0.0
    %331 = vmatprep.subr.mxu0 0.0
    %332 = vmatpush1.msra.mxu0 0.0
    %333 = vmatprep.subr.mxu0 0.0
    %334 = vmatpush1.msra.mxu0 0.0
    %335 = vmatprep.subr.mxu0 0.0
    %336 = vmatpush1.msra.mxu0 0.0
    %337 = vmatprep.subr.mxu0 0.0
    %338 = vmatpush1.msra.mxu0 0.0
    %339 = vmatprep.subr.mxu0 0.0
    %340 = vmatpush1.msra.mxu0 0.0
    %341 = vmatprep.subr.mxu0 0.0
    %342 = vmatpush1.msra.mxu0 0.0
    %343 = vmatprep.subr.mxu0 0.0
    %344 = vmatpush1.msra.mxu0 0.0
    %345 = vmatprep.subr.mxu0 0.0
    %346 = vmatpush1.msra.mxu0 0.0
    %347 = vmatprep.subr.mxu0 0.0
    %348 = vmatpush1.msra.mxu0 0.0
    %349 = vmatprep.subr.mxu0 0.0
    %350 = vmatpush1.msra.mxu0 0.0
    %351 = vmatprep.subr.mxu0 0.0
    %352 = vmatpush1.msra.mxu0 0.0
    %353 = vmatprep.subr.mxu0 0.0
    %354 = vmatpush1.msra.mxu0 0.0
    %355 = vmatprep.subr.mxu0 0.0
    %356 = vmatpush1.msra.mxu0 0.0
    %357 = vmatprep.subr.mxu0 0.0
    %358 = vmatpush1.msra.mxu0 0.0
    %359 = vmatprep.subr.mxu0 0.0
    %360 = vmatpush1.msra.mxu0 0.0
    %361 = vmatprep.subr.mxu0 0.0
    %362 = vmatpush1.msra.mxu0 0.0
    %363 = vmatprep.subr.mxu0 0.0
    %364 = vmatpush1.msra.mxu0 0.0
    %365 = vmatprep.subr.mxu0 0.0
    %366 = vmatpush1.msra.mxu0 0.0
    %367 = vmatprep.subr.mxu0 0.0
    %368 = vmatpush1.msra.mxu0 0.0
    %369 = vmatprep.subr.mxu0 0.0
    %370 = vmatpush1.msra.mxu0 0.0
    %371 = vmatprep.subr.mxu0 0.0
    %372 = vmatpush1.msra.mxu0 0.0
    %373 = vmatprep.subr.mxu0 0.0
    %374 = vmatpush1.msra.mxu0 0.0
    %375 = vmatprep.subr.mxu0 0.0
    %376 = vmatpush1.msra.mxu0 0.0
    %377 = vmatprep.subr.mxu0 0.0
    %378 = vmatpush1.msra.mxu0 0.0
    %379 = vmatprep.mubr.f32.mxu0 0.0
    %380 = vmatmul.mubr.f32.gmra.mrb[0].mxu0 %v300
    %v381 = vpop.f32.mrb[0].mxu0
    %v382 = vadd.f32 0.0, %v381
    %v383 = vpop.f32.mrb[0].mxu0
    %v384 = vadd.f32 0.0, %v383
    %385 = vdwg.mxu0
    %386 = vmatprep.subr.mxu0 %v313
    %387 = vmatpush1.msra.mxu0 %v310
    %388 = vmatprep.subr.mxu0 0.0
    %389 = vmatpush1.msra.mxu0 0.0
    %390 = vmatprep.subr.mxu0 0.0
    %391 = vmatpush1.msra.mxu0 0.0
    %392 = vmatprep.subr.mxu0 0.0
    %393 = vmatpush1.msra.mxu0 0.0
    %394 = vmatprep.subr.mxu0 0.0
    %395 = vmatpush1.msra.mxu0 0.0
    %396 = vmatprep.subr.mxu0 0.0
    %397 = vmatpush1.msra.mxu0 0.0
    %398 = vmatprep.subr.mxu0 0.0
    %399 = vmatpush1.msra.mxu0 0.0
    %400 = vmatprep.subr.mxu0 0.0
    %401 = vmatpush1.msra.mxu0 0.0
    %402 = vmatprep.subr.mxu0 0.0
    %403 = vmatpush1.msra.mxu0 0.0
    %404 = vmatprep.subr.mxu0 0.0
    %405 = vmatpush1.msra.mxu0 0.0
    %406 = vmatprep.subr.mxu0 0.0
    %407 = vmatpush1.msra.mxu0 0.0
    %408 = vmatprep.subr.mxu0 0.0
    %409 = vmatpush1.msra.mxu0 0.0
    %410 = vmatprep.subr.mxu0 0.0
    %411 = vmatpush1.msra.mxu0 0.0
    %412 = vmatprep.subr.mxu0 0.0
    %413 = vmatpush1.msra.mxu0 0.0
    %414 = vmatprep.subr.mxu0 0.0
    %415 = vmatpush1.msra.mxu0 0.0
    %416 = vmatprep.subr.mxu0 0.0
    %417 = vmatpush1.msra.mxu0 0.0
    %418 = vmatprep.subr.mxu0 0.0
    %419 = vmatpush1.msra.mxu0 0.0
    %420 = vmatprep.subr.mxu0 0.0
    %421 = vmatpush1.msra.mxu0 0.0
    %422 = vmatprep.subr.mxu0 0.0
    %423 = vmatpush1.msra.mxu0 0.0
    %424 = vmatprep.subr.mxu0 0.0
    %425 = vmatpush1.msra.mxu0 0.0
    %426 = vmatprep.subr.mxu0 0.0
    %427 = vmatpush1.msra.mxu0 0.0
    %428 = vmatprep.subr.mxu0 0.0
    %429 = vmatpush1.msra.mxu0 0.0
    %430 = vmatprep.subr.mxu0 0.0
    %431 = vmatpush1.msra.mxu0 0.0
    %432 = vmatprep.subr.mxu0 0.0
    %433 = vmatpush1.msra.mxu0 0.0
    %434 = vmatprep.subr.mxu0 0.0
    %435 = vmatpush1.msra.mxu0 0.0
    %436 = vmatprep.subr.mxu0 0.0
    %437 = vmatpush1.msra.mxu0 0.0
    %438 = vmatprep.subr.mxu0 0.0
    %439 = vmatpush1.msra.mxu0 0.0
    %440 = vmatprep.subr.mxu0 0.0
    %441 = vmatpush1.msra.mxu0 0.0
    %442 = vmatprep.subr.mxu0 0.0
    %443 = vmatpush1.msra.mxu0 0.0
    %444 = vmatprep.subr.mxu0 0.0
    %445 = vmatpush1.msra.mxu0 0.0
    %446 = vmatprep.subr.mxu0 0.0
    %447 = vmatpush1.msra.mxu0 0.0
    %448 = vmatprep.subr.mxu0 0.0
    %449 = vmatpush1.msra.mxu0 0.0
    %450 = vmatprep.mubr.f32.mxu0 0.0
    %451 = vmatmul.mubr.f32.gmra.mrb[0].mxu0 %v300
    %v452 = vpop.f32.mrb[0].mxu0
    %v453 = vadd.f32 0.0, %v452
    %v454 = vpop.f32.mrb[0].mxu0
    %v455 = vadd.f32 0.0, %v454
    %456 = vdwg.mxu0
    %v457 = vsel %vm299, %v35, 0
    %v460 = vsel %vm302, %v275, 0
    %v463 = vsel %vm302, %v276, 0
    %v466 = vsel %vm302, %v277, 0
    %v469 = vsel %vm302, %v278, 0
    %471 = vmatprep.subr.mxu0 %v463
    %472 = vmatpush1.msra.mxu0 %v460
    %473 = vmatprep.subr.mxu0 0.0
    %474 = vmatpush1.msra.mxu0 0.0
    %475 = vmatprep.subr.mxu0 0.0
    %476 = vmatpush1.msra.mxu0 0.0
    %477 = vmatprep.subr.mxu0 0.0
    %478 = vmatpush1.msra.mxu0 0.0
    %479 = vmatprep.subr.mxu0 0.0
    %480 = vmatpush1.msra.mxu0 0.0
    %481 = vmatprep.subr.mxu0 0.0
    %482 = vmatpush1.msra.mxu0 0.0
    %483 = vmatprep.subr.mxu0 0.0
    %484 = vmatpush1.msra.mxu0 0.0
    %485 = vmatprep.subr.mxu0 0.0
    %486 = vmatpush1.msra.mxu0 0.0
    %487 = vmatprep.subr.mxu0 0.0
    %488 = vmatpush1.msra.mxu0 0.0
    %489 = vmatprep.subr.mxu0 0.0
    %490 = vmatpush1.msra.mxu0 0.0
    %491 = vmatprep.subr.mxu0 0.0
    %492 = vmatpush1.msra.mxu0 0.0
    %493 = vmatprep.subr.mxu0 0.0
    %494 = vmatpush1.msra.mxu0 0.0
    %495 = vmatprep.subr.mxu0 0.0
    %496 = vmatpush1.msra.mxu0 0.0
    %497 = vmatprep.subr.mxu0 0.0
    %498 = vmatpush1.msra.mxu0 0.0
    %499 = vmatprep.subr.mxu0 0.0
    %500 = vmatpush1.msra.mxu0 0.0
    %501 = vmatprep.subr.mxu0 0.0
    %502 = vmatpush1.msra.mxu0 0.0
    %503 = vmatprep.subr.mxu0 0.0
    %504 = vmatpush1.msra.mxu0 0.0
    %505 = vmatprep.subr.mxu0 0.0
    %506 = vmatpush1.msra.mxu0 0.0
    %507 = vmatprep.subr.mxu0 0.0
    %508 = vmatpush1.msra.mxu0 0.0
    %509 = vmatprep.subr.mxu0 0.0
    %510 = vmatpush1.msra.mxu0 0.0
    %511 = vmatprep.subr.mxu0 0.0
    %512 = vmatpush1.msra.mxu0 0.0
    %513 = vmatprep.subr.mxu0 0.0
    %514 = vmatpush1.msra.mxu0 0.0
    %515 = vmatprep.subr.mxu0 0.0
    %516 = vmatpush1.msra.mxu0 0.0
    %517 = vmatprep.subr.mxu0 0.0
    %518 = vmatpush1.msra.mxu0 0.0
    %519 = vmatprep.subr.mxu0 0.0
    %520 = vmatpush1.msra.mxu0 0.0
    %521 = vmatprep.subr.mxu0 0.0
    %522 = vmatpush1.msra.mxu0 0.0
    %523 = vmatprep.subr.mxu0 0.0
    %524 = vmatpush1.msra.mxu0 0.0
    %525 = vmatprep.subr.mxu0 0.0
    %526 = vmatpush1.msra.mxu0 0.0
    %527 = vmatprep.subr.mxu0 0.0
    %528 = vmatpush1.msra.mxu0 0.0
    %529 = vmatprep.subr.mxu0 0.0
    %530 = vmatpush1.msra.mxu0 0.0
    %531 = vmatprep.subr.mxu0 0.0
    %532 = vmatpush1.msra.mxu0 0.0
    %533 = vmatprep.subr.mxu0 0.0
    %534 = vmatpush1.msra.mxu0 0.0
    %535 = vmatprep.mubr.f32.mxu0 0.0
    %536 = vmatmul.mubr.f32.gmra.mrb[0].mxu0 %v457
    %v537 = vpop.f32.mrb[0].mxu0
    %v538 = vadd.f32 %v382, %v537
    %v539 = vpop.f32.mrb[0].mxu0
    %v540 = vadd.f32 %v384, %v539
    %541 = vdwg.mxu0
    %542 = vmatprep.subr.mxu0 %v469
    %543 = vmatpush1.msra.mxu0 %v466
    %544 = vmatprep.subr.mxu0 0.0
    %545 = vmatpush1.msra.mxu0 0.0
    %546 = vmatprep.subr.mxu0 0.0
    %547 = vmatpush1.msra.mxu0 0.0
    %548 = vmatprep.subr.mxu0 0.0
    %549 = vmatpush1.msra.mxu0 0.0
    %550 = vmatprep.subr.mxu0 0.0
    %551 = vmatpush1.msra.mxu0 0.0
    %552 = vmatprep.subr.mxu0 0.0
    %553 = vmatpush1.msra.mxu0 0.0
    %554 = vmatprep.subr.mxu0 0.0
    %555 = vmatpush1.msra.mxu0 0.0
    %556 = vmatprep.subr.mxu0 0.0
    %557 = vmatpush1.msra.mxu0 0.0
    %558 = vmatprep.subr.mxu0 0.0
    %559 = vmatpush1.msra.mxu0 0.0
    %560 = vmatprep.subr.mxu0 0.0
    %561 = vmatpush1.msra.mxu0 0.0
    %562 = vmatprep.subr.mxu0 0.0
    %563 = vmatpush1.msra.mxu0 0.0
    %564 = vmatprep.subr.mxu0 0.0
    %565 = vmatpush1.msra.mxu0 0.0
    %566 = vmatprep.subr.mxu0 0.0
    %567 = vmatpush1.msra.mxu0 0.0
    %568 = vmatprep.subr.mxu0 0.0
    %569 = vmatpush1.msra.mxu0 0.0
    %570 = vmatprep.subr.mxu0 0.0
    %571 = vmatpush1.msra.mxu0 0.0
    %572 = vmatprep.subr.mxu0 0.0
    %573 = vmatpush1.msra.mxu0 0.0
    %574 = vmatprep.subr.mxu0 0.0
    %575 = vmatpush1.msra.mxu0 0.0
    %576 = vmatprep.subr.mxu0 0.0
    %577 = vmatpush1.msra.mxu0 0.0
    %578 = vmatprep.subr.mxu0 0.0
    %579 = vmatpush1.msra.mxu0 0.0
    %580 = vmatprep.subr.mxu0 0.0
    %581 = vmatpush1.msra.mxu0 0.0
    %582 = vmatprep.subr.mxu0 0.0
    %583 = vmatpush1.msra.mxu0 0.0
    %584 = vmatprep.subr.mxu0 0.0
    %585 = vmatpush1.msra.mxu0 0.0
    %586 = vmatprep.subr.mxu0 0.0
    %587 = vmatpush1.msra.mxu0 0.0
    %588 = vmatprep.subr.mxu0 0.0
    %589 = vmatpush1.msra.mxu0 0.0
    %590 = vmatprep.subr.mxu0 0.0
    %591 = vmatpush1.msra.mxu0 0.0
    %592 = vmatprep.subr.mxu0 0.0
    %593 = vmatpush1.msra.mxu0 0.0
    %594 = vmatprep.subr.mxu0 0.0
    %595 = vmatpush1.msra.mxu0 0.0
    %596 = vmatprep.subr.mxu0 0.0
    %597 = vmatpush1.msra.mxu0 0.0
    %598 = vmatprep.subr.mxu0 0.0
    %599 = vmatpush1.msra.mxu0 0.0
    %600 = vmatprep.subr.mxu0 0.0
    %601 = vmatpush1.msra.mxu0 0.0
    %602 = vmatprep.subr.mxu0 0.0
    %603 = vmatpush1.msra.mxu0 0.0
    %604 = vmatprep.subr.mxu0 0.0
    %605 = vmatpush1.msra.mxu0 0.0
    %606 = vmatprep.mubr.f32.mxu0 0.0
    %607 = vmatmul.mubr.f32.gmra.mrb[0].mxu0 %v457
    %v608 = vpop.f32.mrb[0].mxu0
    %v609 = vadd.f32 %v453, %v608
    %v610 = vpop.f32.mrb[0].mxu0
    %v611 = vadd.f32 %v455, %v610
    %612 = vdwg.mxu0
    %613 = vrot.lane.b32.xlu0 %v193, 15
    %v614 = vpop.permute.xlu0 %613
    %615 = vrot.lane.b32.xlu0 %v194, 15
    %v616 = vpop.permute.xlu0 %615
    %617 = vrot.lane.b32.xlu0 %v195, 15
    %v618 = vpop.permute.xlu0 %617
    %619 = vrot.lane.b32.xlu0 %v196, 15
    %v620 = vpop.permute.xlu0 %619
    %vm621 = vcmp.lt.s32.totalorder %v198, 15
    %v622 = vsel %vm621, %v618, %v620
    %v623 = vsel %vm621, %v616, %v618
    %v624 = vsel %vm621, %v614, %v616
    %v625 = vsel %vm621, %v620, %v614
    %v626 = vmul.f32 %v625, %v230
    %v627 = vmul.f32 %v624, %v231
    %v628 = vmul.f32 %v623, %v232
    %v629 = vmul.f32 %v622, %v233
    %v630 = vmul.f32 %v626, %v242
    %v631 = vmul.f32 %v627, %v243
    %v632 = vmul.f32 %v628, %v244
    %v633 = vmul.f32 %v629, %v245
    %634 = vrot.lane.b32.xlu0 %v35, 120
    %v635 = vpop.permute.xlu0 %634
    %v636 = vsel %vm299, %v635, 0
    %v639 = vsel %vm302, %v630, 0
    %v642 = vsel %vm302, %v631, 0
    %v645 = vsel %vm302, %v632, 0
    %v648 = vsel %vm302, %v633, 0
    %650 = vmatprep.subr.mxu0 %v642
    %651 = vmatpush1.msra.mxu0 %v639
    %652 = vmatprep.subr.mxu0 0.0
    %653 = vmatpush1.msra.mxu0 0.0
    %654 = vmatprep.subr.mxu0 0.0
    %655 = vmatpush1.msra.mxu0 0.0
    %656 = vmatprep.subr.mxu0 0.0
    %657 = vmatpush1.msra.mxu0 0.0
    %658 = vmatprep.subr.mxu0 0.0
    %659 = vmatpush1.msra.mxu0 0.0
    %660 = vmatprep.subr.mxu0 0.0
    %661 = vmatpush1.msra.mxu0 0.0
    %662 = vmatprep.subr.mxu0 0.0
    %663 = vmatpush1.msra.mxu0 0.0
    %664 = vmatprep.subr.mxu0 0.0
    %665 = vmatpush1.msra.mxu0 0.0
    %666 = vmatprep.subr.mxu0 0.0
    %667 = vmatpush1.msra.mxu0 0.0
    %668 = vmatprep.subr.mxu0 0.0
    %669 = vmatpush1.msra.mxu0 0.0
    %670 = vmatprep.subr.mxu0 0.0
    %671 = vmatpush1.msra.mxu0 0.0
    %672 = vmatprep.subr.mxu0 0.0
    %673 = vmatpush1.msra.mxu0 0.0
    %674 = vmatprep.subr.mxu0 0.0
    %675 = vmatpush1.msra.mxu0 0.0
    %676 = vmatprep.subr.mxu0 0.0
    %677 = vmatpush1.msra.mxu0 0.0
    %678 = vmatprep.subr.mxu0 0.0
    %679 = vmatpush1.msra.mxu0 0.0
    %680 = vmatprep.subr.mxu0 0.0
    %681 = vmatpush1.msra.mxu0 0.0
    %682 = vmatprep.subr.mxu0 0.0
    %683 = vmatpush1.msra.mxu0 0.0
    %684 = vmatprep.subr.mxu0 0.0
    %685 = vmatpush1.msra.mxu0 0.0
    %686 = vmatprep.subr.mxu0 0.0
    %687 = vmatpush1.msra.mxu0 0.0
    %688 = vmatprep.subr.mxu0 0.0
    %689 = vmatpush1.msra.mxu0 0.0
    %690 = vmatprep.subr.mxu0 0.0
    %691 = vmatpush1.msra.mxu0 0.0
    %692 = vmatprep.subr.mxu0 0.0
    %693 = vmatpush1.msra.mxu0 0.0
    %694 = vmatprep.subr.mxu0 0.0
    %695 = vmatpush1.msra.mxu0 0.0
    %696 = vmatprep.subr.mxu0 0.0
    %697 = vmatpush1.msra.mxu0 0.0
    %698 = vmatprep.subr.mxu0 0.0
    %699 = vmatpush1.msra.mxu0 0.0
    %700 = vmatprep.subr.mxu0 0.0
    %701 = vmatpush1.msra.mxu0 0.0
    %702 = vmatprep.subr.mxu0 0.0
    %703 = vmatpush1.msra.mxu0 0.0
    %704 = vmatprep.subr.mxu0 0.0
    %705 = vmatpush1.msra.mxu0 0.0
    %706 = vmatprep.subr.mxu0 0.0
    %707 = vmatpush1.msra.mxu0 0.0
    %708 = vmatprep.subr.mxu0 0.0
    %709 = vmatpush1.msra.mxu0 0.0
    %710 = vmatprep.subr.mxu0 0.0
    %711 = vmatpush1.msra.mxu0 0.0
    %712 = vmatprep.subr.mxu0 0.0
    %713 = vmatpush1.msra.mxu0 0.0
    %714 = vmatprep.mubr.f32.mxu0 0.0
    %715 = vmatmul.mubr.f32.gmra.mrb[0].mxu0 %v636
    %v716 = vpop.f32.mrb[0].mxu0
    %v717 = vadd.f32 0.0, %v716
    %v718 = vpop.f32.mrb[0].mxu0
    %v719 = vadd.f32 0.0, %v718
    %720 = vdwg.mxu0
    %721 = vmatprep.subr.mxu0 %v648
    %722 = vmatpush1.msra.mxu0 %v645
    %723 = vmatprep.subr.mxu0 0.0
    %724 = vmatpush1.msra.mxu0 0.0
    %725 = vmatprep.subr.mxu0 0.0
    %726 = vmatpush1.msra.mxu0 0.0
    %727 = vmatprep.subr.mxu0 0.0
    %728 = vmatpush1.msra.mxu0 0.0
    %729 = vmatprep.subr.mxu0 0.0
    %730 = vmatpush1.msra.mxu0 0.0
    %731 = vmatprep.subr.mxu0 0.0
    %732 = vmatpush1.msra.mxu0 0.0
    %733 = vmatprep.subr.mxu0 0.0
    %734 = vmatpush1.msra.mxu0 0.0
    %735 = vmatprep.subr.mxu0 0.0
    %736 = vmatpush1.msra.mxu0 0.0
    %737 = vmatprep.subr.mxu0 0.0
    %738 = vmatpush1.msra.mxu0 0.0
    %739 = vmatprep.subr.mxu0 0.0
    %740 = vmatpush1.msra.mxu0 0.0
    %741 = vmatprep.subr.mxu0 0.0
    %742 = vmatpush1.msra.mxu0 0.0
    %743 = vmatprep.subr.mxu0 0.0
    %744 = vmatpush1.msra.mxu0 0.0
    %745 = vmatprep.subr.mxu0 0.0
    %746 = vmatpush1.msra.mxu0 0.0
    %747 = vmatprep.subr.mxu0 0.0
    %748 = vmatpush1.msra.mxu0 0.0
    %749 = vmatprep.subr.mxu0 0.0
    %750 = vmatpush1.msra.mxu0 0.0
    %751 = vmatprep.subr.mxu0 0.0
    %752 = vmatpush1.msra.mxu0 0.0
    %753 = vmatprep.subr.mxu0 0.0
    %754 = vmatpush1.msra.mxu0 0.0
    %755 = vmatprep.subr.mxu0 0.0
    %756 = vmatpush1.msra.mxu0 0.0
    %757 = vmatprep.subr.mxu0 0.0
    %758 = vmatpush1.msra.mxu0 0.0
    %759 = vmatprep.subr.mxu0 0.0
    %760 = vmatpush1.msra.mxu0 0.0
    %761 = vmatprep.subr.mxu0 0.0
    %762 = vmatpush1.msra.mxu0 0.0
    %763 = vmatprep.subr.mxu0 0.0
    %764 = vmatpush1.msra.mxu0 0.0
    %765 = vmatprep.subr.mxu0 0.0
    %766 = vmatpush1.msra.mxu0 0.0
    %767 = vmatprep.subr.mxu0 0.0
    %768 = vmatpush1.msra.mxu0 0.0
    %769 = vmatprep.subr.mxu0 0.0
    %770 = vmatpush1.msra.mxu0 0.0
    %771 = vmatprep.subr.mxu0 0.0
    %772 = vmatpush1.msra.mxu0 0.0
    %773 = vmatprep.subr.mxu0 0.0
    %774 = vmatpush1.msra.mxu0 0.0
    %775 = vmatprep.subr.mxu0 0.0
    %776 = vmatpush1.msra.mxu0 0.0
    %777 = vmatprep.subr.mxu0 0.0
    %778 = vmatpush1.msra.mxu0 0.0
    %779 = vmatprep.subr.mxu0 0.0
    %780 = vmatpush1.msra.mxu0 0.0
    %781 = vmatprep.subr.mxu0 0.0
    %782 = vmatpush1.msra.mxu0 0.0
    %783 = vmatprep.subr.mxu0 0.0
    %784 = vmatpush1.msra.mxu0 0.0
    %785 = vmatprep.mubr.f32.mxu0 0.0
    %786 = vmatmul.mubr.f32.gmra.mrb[0].mxu0 %v636
    %v787 = vpop.f32.mrb[0].mxu0
    %v788 = vadd.f32 0.0, %v787
    %v789 = vpop.f32.mrb[0].mxu0
    %v790 = vadd.f32 0.0, %v789
    %791 = vdwg.mxu0
    %v792 = vadd.f32 %v538, %v717
    %v793 = vadd.f32 %v540, %v719
    %v794 = vadd.f32 %v609, %v788
    %v795 = vadd.f32 %v611, %v790
    %796 = vrot.lane.b32.xlu0 %v193, 1
    %v797 = vpop.permute.xlu0 %796
    %798 = vrot.lane.b32.xlu0 %v194, 1
    %v799 = vpop.permute.xlu0 %798
    %800 = vrot.lane.b32.xlu0 %v195, 1
    %v801 = vpop.permute.xlu0 %800
    %802 = vrot.lane.b32.xlu0 %v196, 1
    %v803 = vpop.permute.xlu0 %802
    %vm804 = vcmp.lt.s32.totalorder %v198, 1
    %v805 = vsel %vm804, %v801, %v803
    %v806 = vsel %vm804, %v799, %v801
    %v807 = vsel %vm804, %v797, %v799
    %v808 = vsel %vm804, %v803, %v797
    %v809 = vmul.f32 %v808, %v218
    %v810 = vmul.f32 %v807, %v219
    %v811 = vmul.f32 %v806, %v220
    %v812 = vmul.f32 %v805, %v221
    %813 = vrot.lane.b32.xlu0 %v35, 116
    %v814 = vpop.permute.xlu0 %813
    %v815 = vsel %vm299, %v814, 0
    %v818 = vsel %vm302, %v809, 0
    %v821 = vsel %vm302, %v810, 0
    %v824 = vsel %vm302, %v811, 0
    %v827 = vsel %vm302, %v812, 0
    %829 = vmatprep.subr.mxu0 %v821
    %830 = vmatpush1.msra.mxu0 %v818
    %831 = vmatprep.subr.mxu0 0.0
    %832 = vmatpush1.msra.mxu0 0.0
    %833 = vmatprep.subr.mxu0 0.0
    %834 = vmatpush1.msra.mxu0 0.0
    %835 = vmatprep.subr.mxu0 0.0
    %836 = vmatpush1.msra.mxu0 0.0
    %837 = vmatprep.subr.mxu0 0.0
    %838 = vmatpush1.msra.mxu0 0.0
    %839 = vmatprep.subr.mxu0 0.0
    %840 = vmatpush1.msra.mxu0 0.0
    %841 = vmatprep.subr.mxu0 0.0
    %842 = vmatpush1.msra.mxu0 0.0
    %843 = vmatprep.subr.mxu0 0.0
    %844 = vmatpush1.msra.mxu0 0.0
    %845 = vmatprep.subr.mxu0 0.0
    %846 = vmatpush1.msra.mxu0 0.0
    %847 = vmatprep.subr.mxu0 0.0
    %848 = vmatpush1.msra.mxu0 0.0
    %849 = vmatprep.subr.mxu0 0.0
    %850 = vmatpush1.msra.mxu0 0.0
    %851 = vmatprep.subr.mxu0 0.0
    %852 = vmatpush1.msra.mxu0 0.0
    %853 = vmatprep.subr.mxu0 0.0
    %854 = vmatpush1.msra.mxu0 0.0
    %855 = vmatprep.subr.mxu0 0.0
    %856 = vmatpush1.msra.mxu0 0.0
    %857 = vmatprep.subr.mxu0 0.0
    %858 = vmatpush1.msra.mxu0 0.0
    %859 = vmatprep.subr.mxu0 0.0
    %860 = vmatpush1.msra.mxu0 0.0
    %861 = vmatprep.subr.mxu0 0.0
    %862 = vmatpush1.msra.mxu0 0.0
    %863 = vmatprep.subr.mxu0 0.0
    %864 = vmatpush1.msra.mxu0 0.0
    %865 = vmatprep.subr.mxu0 0.0
    %866 = vmatpush1.msra.mxu0 0.0
    %867 = vmatprep.subr.mxu0 0.0
    %868 = vmatpush1.msra.mxu0 0.0
    %869 = vmatprep.subr.mxu0 0.0
    %870 = vmatpush1.msra.mxu0 0.0
    %871 = vmatprep.subr.mxu0 0.0
    %872 = vmatpush1.msra.mxu0 0.0
    %873 = vmatprep.subr.mxu0 0.0
    %874 = vmatpush1.msra.mxu0 0.0
    %875 = vmatprep.subr.mxu0 0.0
    %876 = vmatpush1.msra.mxu0 0.0
    %877 = vmatprep.subr.mxu0 0.0
    %878 = vmatpush1.msra.mxu0 0.0
    %879 = vmatprep.subr.mxu0 0.0
    %880 = vmatpush1.msra.mxu0 0.0
    %881 = vmatprep.subr.mxu0 0.0
    %882 = vmatpush1.msra.mxu0 0.0
    %883 = vmatprep.subr.mxu0 0.0
    %884 = vmatpush1.msra.mxu0 0.0
    %885 = vmatprep.subr.mxu0 0.0
    %886 = vmatpush1.msra.mxu0 0.0
    %887 = vmatprep.subr.mxu0 0.0
    %888 = vmatpush1.msra.mxu0 0.0
    %889 = vmatprep.subr.mxu0 0.0
    %890 = vmatpush1.msra.mxu0 0.0
    %891 = vmatprep.subr.mxu0 0.0
    %892 = vmatpush1.msra.mxu0 0.0
    %893 = vmatprep.mubr.f32.mxu0 0.0
    %894 = vmatmul.mubr.f32.gmra.mrb[0].mxu0 %v815
    %v895 = vpop.f32.mrb[0].mxu0
    %v896 = vadd.f32 0.0, %v895
    %v897 = vpop.f32.mrb[0].mxu0
    %v898 = vadd.f32 0.0, %v897
    %899 = vdwg.mxu0
    %900 = vmatprep.subr.mxu0 %v827
    %901 = vmatpush1.msra.mxu0 %v824
    %902 = vmatprep.subr.mxu0 0.0
    %903 = vmatpush1.msra.mxu0 0.0
    %904 = vmatprep.subr.mxu0 0.0
    %905 = vmatpush1.msra.mxu0 0.0
    %906 = vmatprep.subr.mxu0 0.0
    %907 = vmatpush1.msra.mxu0 0.0
    %908 = vmatprep.subr.mxu0 0.0
    %909 = vmatpush1.msra.mxu0 0.0
    %910 = vmatprep.subr.mxu0 0.0
    %911 = vmatpush1.msra.mxu0 0.0
    %912 = vmatprep.subr.mxu0 0.0
    %913 = vmatpush1.msra.mxu0 0.0
    %914 = vmatprep.subr.mxu0 0.0
    %915 = vmatpush1.msra.mxu0 0.0
    %916 = vmatprep.subr.mxu0 0.0
    %917 = vmatpush1.msra.mxu0 0.0
    %918 = vmatprep.subr.mxu0 0.0
    %919 = vmatpush1.msra.mxu0 0.0
    %920 = vmatprep.subr.mxu0 0.0
    %921 = vmatpush1.msra.mxu0 0.0
    %922 = vmatprep.subr.mxu0 0.0
    %923 = vmatpush1.msra.mxu0 0.0
    %924 = vmatprep.subr.mxu0 0.0
    %925 = vmatpush1.msra.mxu0 0.0
    %926 = vmatprep.subr.mxu0 0.0
    %927 = vmatpush1.msra.mxu0 0.0
    %928 = vmatprep.subr.mxu0 0.0
    %929 = vmatpush1.msra.mxu0 0.0
    %930 = vmatprep.subr.mxu0 0.0
    %931 = vmatpush1.msra.mxu0 0.0
    %932 = vmatprep.subr.mxu0 0.0
    %933 = vmatpush1.msra.mxu0 0.0
    %934 = vmatprep.subr.mxu0 0.0
    %935 = vmatpush1.msra.mxu0 0.0
    %936 = vmatprep.subr.mxu0 0.0
    %937 = vmatpush1.msra.mxu0 0.0
    %938 = vmatprep.subr.mxu0 0.0
    %939 = vmatpush1.msra.mxu0 0.0
    %940 = vmatprep.subr.mxu0 0.0
    %941 = vmatpush1.msra.mxu0 0.0
    %942 = vmatprep.subr.mxu0 0.0
    %943 = vmatpush1.msra.mxu0 0.0
    %944 = vmatprep.subr.mxu0 0.0
    %945 = vmatpush1.msra.mxu0 0.0
    %946 = vmatprep.subr.mxu0 0.0
    %947 = vmatpush1.msra.mxu0 0.0
    %948 = vmatprep.subr.mxu0 0.0
    %949 = vmatpush1.msra.mxu0 0.0
    %950 = vmatprep.subr.mxu0 0.0
    %951 = vmatpush1.msra.mxu0 0.0
    %952 = vmatprep.subr.mxu0 0.0
    %953 = vmatpush1.msra.mxu0 0.0
    %954 = vmatprep.subr.mxu0 0.0
    %955 = vmatpush1.msra.mxu0 0.0
    %956 = vmatprep.subr.mxu0 0.0
    %957 = vmatpush1.msra.mxu0 0.0
    %958 = vmatprep.subr.mxu0 0.0
    %959 = vmatpush1.msra.mxu0 0.0
    %960 = vmatprep.subr.mxu0 0.0
    %961 = vmatpush1.msra.mxu0 0.0
    %962 = vmatprep.subr.mxu0 0.0
    %963 = vmatpush1.msra.mxu0 0.0
    %964 = vmatprep.mubr.f32.mxu0 0.0
    %965 = vmatmul.mubr.f32.gmra.mrb[0].mxu0 %v815
    %v966 = vpop.f32.mrb[0].mxu0
    %v967 = vadd.f32 0.0, %v966
    %v968 = vpop.f32.mrb[0].mxu0
    %v969 = vadd.f32 0.0, %v968
    %970 = vdwg.mxu0
    %v971 = vadd.f32 %v792, %v896
    %v972 = vadd.f32 %v793, %v898
    %v973 = vadd.f32 %v794, %v967
    %v974 = vadd.f32 %v795, %v969
    %975 = vrot.lane.b32.xlu0 %v35, 112
    %v976 = vpop.permute.xlu0 %975
    %v977 = vsel %vm299, %v976, 0
    %v980 = vsel %vm302, %v193, 0
    %v983 = vsel %vm302, %v194, 0
    %v986 = vsel %vm302, %v195, 0
    %v989 = vsel %vm302, %v196, 0
    %991 = vmatprep.subr.mxu0 %v983
    %992 = vmatpush1.msra.mxu0 %v980
    %993 = vmatprep.subr.mxu0 0.0
    %994 = vmatpush1.msra.mxu0 0.0
    %995 = vmatprep.subr.mxu0 0.0
    %996 = vmatpush1.msra.mxu0 0.0
    %997 = vmatprep.subr.mxu0 0.0
    %998 = vmatpush1.msra.mxu0 0.0
    %999 = vmatprep.subr.mxu0 0.0
    %1000 = vmatpush1.msra.mxu0 0.0
    %1001 = vmatprep.subr.mxu0 0.0
    %1002 = vmatpush1.msra.mxu0 0.0
    %1003 = vmatprep.subr.mxu0 0.0
    %1004 = vmatpush1.msra.mxu0 0.0
    %1005 = vmatprep.subr.mxu0 0.0
    %1006 = vmatpush1.msra.mxu0 0.0
    %1007 = vmatprep.subr.mxu0 0.0
    %1008 = vmatpush1.msra.mxu0 0.0
    %1009 = vmatprep.subr.mxu0 0.0
    %1010 = vmatpush1.msra.mxu0 0.0
    %1011 = vmatprep.subr.mxu0 0.0
    %1012 = vmatpush1.msra.mxu0 0.0
    %1013 = vmatprep.subr.mxu0 0.0
    %1014 = vmatpush1.msra.mxu0 0.0
    %1015 = vmatprep.subr.mxu0 0.0
    %1016 = vmatpush1.msra.mxu0 0.0
    %1017 = vmatprep.subr.mxu0 0.0
    %1018 = vmatpush1.msra.mxu0 0.0
    %1019 = vmatprep.subr.mxu0 0.0
    %1020 = vmatpush1.msra.mxu0 0.0
    %1021 = vmatprep.subr.mxu0 0.0
    %1022 = vmatpush1.msra.mxu0 0.0
    %1023 = vmatprep.subr.mxu0 0.0
    %1024 = vmatpush1.msra.mxu0 0.0
    %1025 = vmatprep.subr.mxu0 0.0
    %1026 = vmatpush1.msra.mxu0 0.0
    %1027 = vmatprep.subr.mxu0 0.0
    %1028 = vmatpush1.msra.mxu0 0.0
    %1029 = vmatprep.subr.mxu0 0.0
    %1030 = vmatpush1.msra.mxu0 0.0
    %1031 = vmatprep.subr.mxu0 0.0
    %1032 = vmatpush1.msra.mxu0 0.0
    %1033 = vmatprep.subr.mxu0 0.0
    %1034 = vmatpush1.msra.mxu0 0.0
    %1035 = vmatprep.subr.mxu0 0.0
    %1036 = vmatpush1.msra.mxu0 0.0
    %1037 = vmatprep.subr.mxu0 0.0
    %1038 = vmatpush1.msra.mxu0 0.0
    %1039 = vmatprep.subr.mxu0 0.0
    %1040 = vmatpush1.msra.mxu0 0.0
    %1041 = vmatprep.subr.mxu0 0.0
    %1042 = vmatpush1.msra.mxu0 0.0
    %1043 = vmatprep.subr.mxu0 0.0
    %1044 = vmatpush1.msra.mxu0 0.0
    %1045 = vmatprep.subr.mxu0 0.0
    %1046 = vmatpush1.msra.mxu0 0.0
    %1047 = vmatprep.subr.mxu0 0.0
    %1048 = vmatpush1.msra.mxu0 0.0
    %1049 = vmatprep.subr.mxu0 0.0
    %1050 = vmatpush1.msra.mxu0 0.0
    %1051 = vmatprep.subr.mxu0 0.0
    %1052 = vmatpush1.msra.mxu0 0.0
    %1053 = vmatprep.subr.mxu0 0.0
    %1054 = vmatpush1.msra.mxu0 0.0
    %1055 = vmatprep.mubr.f32.mxu0 0.0
    %1056 = vmatmul.mubr.f32.gmra.mrb[0].mxu0 %v977
    %v1057 = vpop.f32.mrb[0].mxu0
    %v1058 = vadd.f32 0.0, %v1057
    %v1059 = vpop.f32.mrb[0].mxu0
    %v1060 = vadd.f32 0.0, %v1059
    %1061 = vdwg.mxu0
    %1062 = vmatprep.subr.mxu0 %v989
    %1063 = vmatpush1.msra.mxu0 %v986
    %1064 = vmatprep.subr.mxu0 0.0
    %1065 = vmatpush1.msra.mxu0 0.0
    %1066 = vmatprep.subr.mxu0 0.0
    %1067 = vmatpush1.msra.mxu0 0.0
    %1068 = vmatprep.subr.mxu0 0.0
    %1069 = vmatpush1.msra.mxu0 0.0
    %1070 = vmatprep.subr.mxu0 0.0
    %1071 = vmatpush1.msra.mxu0 0.0
    %1072 = vmatprep.subr.mxu0 0.0
    %1073 = vmatpush1.msra.mxu0 0.0
    %1074 = vmatprep.subr.mxu0 0.0
    %1075 = vmatpush1.msra.mxu0 0.0
    %1076 = vmatprep.subr.mxu0 0.0
    %1077 = vmatpush1.msra.mxu0 0.0
    %1078 = vmatprep.subr.mxu0 0.0
    %1079 = vmatpush1.msra.mxu0 0.0
    %1080 = vmatprep.subr.mxu0 0.0
    %1081 = vmatpush1.msra.mxu0 0.0
    %1082 = vmatprep.subr.mxu0 0.0
    %1083 = vmatpush1.msra.mxu0 0.0
    %1084 = vmatprep.subr.mxu0 0.0
    %1085 = vmatpush1.msra.mxu0 0.0
    %1086 = vmatprep.subr.mxu0 0.0
    %1087 = vmatpush1.msra.mxu0 0.0
    %1088 = vmatprep.subr.mxu0 0.0
    %1089 = vmatpush1.msra.mxu0 0.0
    %1090 = vmatprep.subr.mxu0 0.0
    %1091 = vmatpush1.msra.mxu0 0.0
    %1092 = vmatprep.subr.mxu0 0.0
    %1093 = vmatpush1.msra.mxu0 0.0
    %1094 = vmatprep.subr.mxu0 0.0
    %1095 = vmatpush1.msra.mxu0 0.0
    %1096 = vmatprep.subr.mxu0 0.0
    %1097 = vmatpush1.msra.mxu0 0.0
    %1098 = vmatprep.subr.mxu0 0.0
    %1099 = vmatpush1.msra.mxu0 0.0
    %1100 = vmatprep.subr.mxu0 0.0
    %1101 = vmatpush1.msra.mxu0 0.0
    %1102 = vmatprep.subr.mxu0 0.0
    %1103 = vmatpush1.msra.mxu0 0.0
    %1104 = vmatprep.subr.mxu0 0.0
    %1105 = vmatpush1.msra.mxu0 0.0
    %1106 = vmatprep.subr.mxu0 0.0
    %1107 = vmatpush1.msra.mxu0 0.0
    %1108 = vmatprep.subr.mxu0 0.0
    %1109 = vmatpush1.msra.mxu0 0.0
    %1110 = vmatprep.subr.mxu0 0.0
    %1111 = vmatpush1.msra.mxu0 0.0
    %1112 = vmatprep.subr.mxu0 0.0
    %1113 = vmatpush1.msra.mxu0 0.0
    %1114 = vmatprep.subr.mxu0 0.0
    %1115 = vmatpush1.msra.mxu0 0.0
    %1116 = vmatprep.subr.mxu0 0.0
    %1117 = vmatpush1.msra.mxu0 0.0
    %1118 = vmatprep.subr.mxu0 0.0
    %1119 = vmatpush1.msra.mxu0 0.0
    %1120 = vmatprep.subr.mxu0 0.0
    %1121 = vmatpush1.msra.mxu0 0.0
    %1122 = vmatprep.subr.mxu0 0.0
    %1123 = vmatpush1.msra.mxu0 0.0
    %1124 = vmatprep.subr.mxu0 0.0
    %1125 = vmatpush1.msra.mxu0 0.0
    %1126 = vmatprep.mubr.f32.mxu0 0.0
    %1127 = vmatmul.mubr.f32.gmra.mrb[0].mxu0 %v977
    %v1128 = vpop.f32.mrb[0].mxu0
    %v1129 = vadd.f32 0.0, %v1128
    %v1130 = vpop.f32.mrb[0].mxu0
    %v1131 = vadd.f32 0.0, %v1130
    %1132 = vdwg.mxu0
    %v1133 = vadd.f32 %v971, %v1058
    %v1134 = vadd.f32 %v972, %v1060
    %v1135 = vadd.f32 %v973, %v1129
    %v1136 = vadd.f32 %v974, %v1131
    %1137 = vrot.lane.b32.xlu0 %v193, 127
    %v1138 = vpop.permute.xlu0 %1137
    %1139 = vrot.lane.b32.xlu0 %v194, 127
    %v1140 = vpop.permute.xlu0 %1139
    %1141 = vrot.lane.b32.xlu0 %v195, 127
    %v1142 = vpop.permute.xlu0 %1141
    %1143 = vrot.lane.b32.xlu0 %v196, 127
    %v1144 = vpop.permute.xlu0 %1143
    %vm1145 = vcmp.lt.s32.totalorder %v198, 127
    %v1146 = vsel %vm1145, %v1142, %v1144
    %v1147 = vsel %vm1145, %v1140, %v1142
    %v1148 = vsel %vm1145, %v1138, %v1140
    %v1149 = vsel %vm1145, %v1144, %v1138
    %v1150 = vmul.f32 %v1148, %v230
    %v1151 = vmul.f32 %v1147, %v231
    %v1152 = vmul.f32 %v1146, %v232
    %v1153 = vmul.f32 %v1149, %v233
    %1154 = vrot.lane.b32.xlu0 %v35, 108
    %v1155 = vpop.permute.xlu0 %1154
    %v1156 = vsel %vm299, %v1155, 0
    %v1159 = vsel %vm302, %v1150, 0
    %v1162 = vsel %vm302, %v1151, 0
    %v1165 = vsel %vm302, %v1152, 0
    %v1168 = vsel %vm302, %v1153, 0
    %1170 = vmatprep.subr.mxu0 %v1162
    %1171 = vmatpush1.msra.mxu0 %v1159
    %1172 = vmatprep.subr.mxu0 0.0
    %1173 = vmatpush1.msra.mxu0 0.0
    %1174 = vmatprep.subr.mxu0 0.0
    %1175 = vmatpush1.msra.mxu0 0.0
    %1176 = vmatprep.subr.mxu0 0.0
    %1177 = vmatpush1.msra.mxu0 0.0
    %1178 = vmatprep.subr.mxu0 0.0
    %1179 = vmatpush1.msra.mxu0 0.0
    %1180 = vmatprep.subr.mxu0 0.0
    %1181 = vmatpush1.msra.mxu0 0.0
    %1182 = vmatprep.subr.mxu0 0.0
    %1183 = vmatpush1.msra.mxu0 0.0
    %1184 = vmatprep.subr.mxu0 0.0
    %1185 = vmatpush1.msra.mxu0 0.0
    %1186 = vmatprep.subr.mxu0 0.0
    %1187 = vmatpush1.msra.mxu0 0.0
    %1188 = vmatprep.subr.mxu0 0.0
    %1189 = vmatpush1.msra.mxu0 0.0
    %1190 = vmatprep.subr.mxu0 0.0
    %1191 = vmatpush1.msra.mxu0 0.0
    %1192 = vmatprep.subr.mxu0 0.0
    %1193 = vmatpush1.msra.mxu0 0.0
    %1194 = vmatprep.subr.mxu0 0.0
    %1195 = vmatpush1.msra.mxu0 0.0
    %1196 = vmatprep.subr.mxu0 0.0
    %1197 = vmatpush1.msra.mxu0 0.0
    %1198 = vmatprep.subr.mxu0 0.0
    %1199 = vmatpush1.msra.mxu0 0.0
    %1200 = vmatprep.subr.mxu0 0.0
    %1201 = vmatpush1.msra.mxu0 0.0
    %1202 = vmatprep.subr.mxu0 0.0
    %1203 = vmatpush1.msra.mxu0 0.0
    %1204 = vmatprep.subr.mxu0 0.0
    %1205 = vmatpush1.msra.mxu0 0.0
    %1206 = vmatprep.subr.mxu0 0.0
    %1207 = vmatpush1.msra.mxu0 0.0
    %1208 = vmatprep.subr.mxu0 0.0
    %1209 = vmatpush1.msra.mxu0 0.0
    %1210 = vmatprep.subr.mxu0 0.0
    %1211 = vmatpush1.msra.mxu0 0.0
    %1212 = vmatprep.subr.mxu0 0.0
    %1213 = vmatpush1.msra.mxu0 0.0
    %1214 = vmatprep.subr.mxu0 0.0
    %1215 = vmatpush1.msra.mxu0 0.0
    %1216 = vmatprep.subr.mxu0 0.0
    %1217 = vmatpush1.msra.mxu0 0.0
    %1218 = vmatprep.subr.mxu0 0.0
    %1219 = vmatpush1.msra.mxu0 0.0
    %1220 = vmatprep.subr.mxu0 0.0
    %1221 = vmatpush1.msra.mxu0 0.0
    %1222 = vmatprep.subr.mxu0 0.0
    %1223 = vmatpush1.msra.mxu0 0.0
    %1224 = vmatprep.subr.mxu0 0.0
    %1225 = vmatpush1.msra.mxu0 0.0
    %1226 = vmatprep.subr.mxu0 0.0
    %1227 = vmatpush1.msra.mxu0 0.0
    %1228 = vmatprep.subr.mxu0 0.0
    %1229 = vmatpush1.msra.mxu0 0.0
    %1230 = vmatprep.subr.mxu0 0.0
    %1231 = vmatpush1.msra.mxu0 0.0
    %1232 = vmatprep.subr.mxu0 0.0
    %1233 = vmatpush1.msra.mxu0 0.0
    %1234 = vmatprep.mubr.f32.mxu0 0.0
    %1235 = vmatmul.mubr.f32.gmra.mrb[0].mxu0 %v1156
    %v1236 = vpop.f32.mrb[0].mxu0
    %v1237 = vadd.f32 0.0, %v1236
    %v1238 = vpop.f32.mrb[0].mxu0
    %v1239 = vadd.f32 0.0, %v1238
    %1240 = vdwg.mxu0
    %1241 = vmatprep.subr.mxu0 %v1168
    %1242 = vmatpush1.msra.mxu0 %v1165
    %1243 = vmatprep.subr.mxu0 0.0
    %1244 = vmatpush1.msra.mxu0 0.0
    %1245 = vmatprep.subr.mxu0 0.0
    %1246 = vmatpush1.msra.mxu0 0.0
    %1247 = vmatprep.subr.mxu0 0.0
    %1248 = vmatpush1.msra.mxu0 0.0
    %1249 = vmatprep.subr.mxu0 0.0
    %1250 = vmatpush1.msra.mxu0 0.0
    %1251 = vmatprep.subr.mxu0 0.0
    %1252 = vmatpush1.msra.mxu0 0.0
    %1253 = vmatprep.subr.mxu0 0.0
    %1254 = vmatpush1.msra.mxu0 0.0
    %1255 = vmatprep.subr.mxu0 0.0
    %1256 = vmatpush1.msra.mxu0 0.0
    %1257 = vmatprep.subr.mxu0 0.0
    %1258 = vmatpush1.msra.mxu0 0.0
    %1259 = vmatprep.subr.mxu0 0.0
    %1260 = vmatpush1.msra.mxu0 0.0
    %1261 = vmatprep.subr.mxu0 0.0
    %1262 = vmatpush1.msra.mxu0 0.0
    %1263 = vmatprep.subr.mxu0 0.0
    %1264 = vmatpush1.msra.mxu0 0.0
    %1265 = vmatprep.subr.mxu0 0.0
    %1266 = vmatpush1.msra.mxu0 0.0
    %1267 = vmatprep.subr.mxu0 0.0
    %1268 = vmatpush1.msra.mxu0 0.0
    %1269 = vmatprep.subr.mxu0 0.0
    %1270 = vmatpush1.msra.mxu0 0.0
    %1271 = vmatprep.subr.mxu0 0.0
    %1272 = vmatpush1.msra.mxu0 0.0
    %1273 = vmatprep.subr.mxu0 0.0
    %1274 = vmatpush1.msra.mxu0 0.0
    %1275 = vmatprep.subr.mxu0 0.0
    %1276 = vmatpush1.msra.mxu0 0.0
    %1277 = vmatprep.subr.mxu0 0.0
    %1278 = vmatpush1.msra.mxu0 0.0
    %1279 = vmatprep.subr.mxu0 0.0
    %1280 = vmatpush1.msra.mxu0 0.0
    %1281 = vmatprep.subr.mxu0 0.0
    %1282 = vmatpush1.msra.mxu0 0.0
    %1283 = vmatprep.subr.mxu0 0.0
    %1284 = vmatpush1.msra.mxu0 0.0
    %1285 = vmatprep.subr.mxu0 0.0
    %1286 = vmatpush1.msra.mxu0 0.0
    %1287 = vmatprep.subr.mxu0 0.0
    %1288 = vmatpush1.msra.mxu0 0.0
    %1289 = vmatprep.subr.mxu0 0.0
    %1290 = vmatpush1.msra.mxu0 0.0
    %1291 = vmatprep.subr.mxu0 0.0
    %1292 = vmatpush1.msra.mxu0 0.0
    %1293 = vmatprep.subr.mxu0 0.0
    %1294 = vmatpush1.msra.mxu0 0.0
    %1295 = vmatprep.subr.mxu0 0.0
    %1296 = vmatpush1.msra.mxu0 0.0
    %1297 = vmatprep.subr.mxu0 0.0
    %1298 = vmatpush1.msra.mxu0 0.0
    %1299 = vmatprep.subr.mxu0 0.0
    %1300 = vmatpush1.msra.mxu0 0.0
    %1301 = vmatprep.subr.mxu0 0.0
    %1302 = vmatpush1.msra.mxu0 0.0
    %1303 = vmatprep.subr.mxu0 0.0
    %1304 = vmatpush1.msra.mxu0 0.0
    %1305 = vmatprep.mubr.f32.mxu0 0.0
    %1306 = vmatmul.mubr.f32.gmra.mrb[0].mxu0 %v1156
    %v1307 = vpop.f32.mrb[0].mxu0
    %v1308 = vadd.f32 0.0, %v1307
    %v1309 = vpop.f32.mrb[0].mxu0
    %v1310 = vadd.f32 0.0, %v1309
    %1311 = vdwg.mxu0
    %v1312 = vadd.f32 %v1133, %v1237
    %v1313 = vadd.f32 %v1134, %v1239
    %v1314 = vadd.f32 %v1135, %v1308
    %v1315 = vadd.f32 %v1136, %v1310
    %1316 = vrot.lane.b32.xlu0 %v193, 113
    %v1317 = vpop.permute.xlu0 %1316
    %1318 = vrot.lane.b32.xlu0 %v194, 113
    %v1319 = vpop.permute.xlu0 %1318
    %1320 = vrot.lane.b32.xlu0 %v195, 113
    %v1321 = vpop.permute.xlu0 %1320
    %1322 = vrot.lane.b32.xlu0 %v196, 113
    %v1323 = vpop.permute.xlu0 %1322
    %vm1324 = vcmp.lt.s32.totalorder %v198, 113
    %v1325 = vsel %vm1324, %v1321, %v1323
    %v1326 = vsel %vm1324, %v1319, %v1321
    %v1327 = vsel %vm1324, %v1317, %v1319
    %v1328 = vsel %vm1324, %v1323, %v1317
    %v1329 = vmul.f32 %v1327, %v218
    %v1330 = vmul.f32 %v1326, %v219
    %v1331 = vmul.f32 %v1325, %v220
    %v1332 = vmul.f32 %v1328, %v221
    %v1333 = vmul.f32 %v1329, %v254
    %v1334 = vmul.f32 %v1330, %v255
    %v1335 = vmul.f32 %v1331, %v256
    %v1336 = vmul.f32 %v1332, %v257
    %1337 = vrot.lane.b32.xlu0 %v35, 104
    %v1338 = vpop.permute.xlu0 %1337
    %v1339 = vsel %vm299, %v1338, 0
    %v1342 = vsel %vm302, %v1333, 0
    %v1345 = vsel %vm302, %v1334, 0
    %v1348 = vsel %vm302, %v1335, 0
    %v1351 = vsel %vm302, %v1336, 0
    %1353 = vmatprep.subr.mxu0 %v1345
    %1354 = vmatpush1.msra.mxu0 %v1342
    %1355 = vmatprep.subr.mxu0 0.0
    %1356 = vmatpush1.msra.mxu0 0.0
    %1357 = vmatprep.subr.mxu0 0.0
    %1358 = vmatpush1.msra.mxu0 0.0
    %1359 = vmatprep.subr.mxu0 0.0
    %1360 = vmatpush1.msra.mxu0 0.0
    %1361 = vmatprep.subr.mxu0 0.0
    %1362 = vmatpush1.msra.mxu0 0.0
    %1363 = vmatprep.subr.mxu0 0.0
    %1364 = vmatpush1.msra.mxu0 0.0
    %1365 = vmatprep.subr.mxu0 0.0
    %1366 = vmatpush1.msra.mxu0 0.0
    %1367 = vmatprep.subr.mxu0 0.0
    %1368 = vmatpush1.msra.mxu0 0.0
    %1369 = vmatprep.subr.mxu0 0.0
    %1370 = vmatpush1.msra.mxu0 0.0
    %1371 = vmatprep.subr.mxu0 0.0
    %1372 = vmatpush1.msra.mxu0 0.0
    %1373 = vmatprep.subr.mxu0 0.0
    %1374 = vmatpush1.msra.mxu0 0.0
    %1375 = vmatprep.subr.mxu0 0.0
    %1376 = vmatpush1.msra.mxu0 0.0
    %1377 = vmatprep.subr.mxu0 0.0
    %1378 = vmatpush1.msra.mxu0 0.0
    %1379 = vmatprep.subr.mxu0 0.0
    %1380 = vmatpush1.msra.mxu0 0.0
    %1381 = vmatprep.subr.mxu0 0.0
    %1382 = vmatpush1.msra.mxu0 0.0
    %1383 = vmatprep.subr.mxu0 0.0
    %1384 = vmatpush1.msra.mxu0 0.0
    %1385 = vmatprep.subr.mxu0 0.0
    %1386 = vmatpush1.msra.mxu0 0.0
    %1387 = vmatprep.subr.mxu0 0.0
    %1388 = vmatpush1.msra.mxu0 0.0
    %1389 = vmatprep.subr.mxu0 0.0
    %1390 = vmatpush1.msra.mxu0 0.0
    %1391 = vmatprep.subr.mxu0 0.0
    %1392 = vmatpush1.msra.mxu0 0.0
    %1393 = vmatprep.subr.mxu0 0.0
    %1394 = vmatpush1.msra.mxu0 0.0
    %1395 = vmatprep.subr.mxu0 0.0
    %1396 = vmatpush1.msra.mxu0 0.0
    %1397 = vmatprep.subr.mxu0 0.0
    %1398 = vmatpush1.msra.mxu0 0.0
    %1399 = vmatprep.subr.mxu0 0.0
    %1400 = vmatpush1.msra.mxu0 0.0
    %1401 = vmatprep.subr.mxu0 0.0
    %1402 = vmatpush1.msra.mxu0 0.0
    %1403 = vmatprep.subr.mxu0 0.0
    %1404 = vmatpush1.msra.mxu0 0.0
    %1405 = vmatprep.subr.mxu0 0.0
    %1406 = vmatpush1.msra.mxu0 0.0
    %1407 = vmatprep.subr.mxu0 0.0
    %1408 = vmatpush1.msra.mxu0 0.0
    %1409 = vmatprep.subr.mxu0 0.0
    %1410 = vmatpush1.msra.mxu0 0.0
    %1411 = vmatprep.subr.mxu0 0.0
    %1412 = vmatpush1.msra.mxu0 0.0
    %1413 = vmatprep.subr.mxu0 0.0
    %1414 = vmatpush1.msra.mxu0 0.0
    %1415 = vmatprep.subr.mxu0 0.0
    %1416 = vmatpush1.msra.mxu0 0.0
    %1417 = vmatprep.mubr.f32.mxu0 0.0
    %1418 = vmatmul.mubr.f32.gmra.mrb[0].mxu0 %v1339
    %v1419 = vpop.f32.mrb[0].mxu0
    %v1420 = vadd.f32 0.0, %v1419
    %v1421 = vpop.f32.mrb[0].mxu0
    %v1422 = vadd.f32 0.0, %v1421
    %1423 = vdwg.mxu0
    %1424 = vmatprep.subr.mxu0 %v1351
    %1425 = vmatpush1.msra.mxu0 %v1348
    %1426 = vmatprep.subr.mxu0 0.0
    %1427 = vmatpush1.msra.mxu0 0.0
    %1428 = vmatprep.subr.mxu0 0.0
    %1429 = vmatpush1.msra.mxu0 0.0
    %1430 = vmatprep.subr.mxu0 0.0
    %1431 = vmatpush1.msra.mxu0 0.0
    %1432 = vmatprep.subr.mxu0 0.0
    %1433 = vmatpush1.msra.mxu0 0.0
    %1434 = vmatprep.subr.mxu0 0.0
    %1435 = vmatpush1.msra.mxu0 0.0
    %1436 = vmatprep.subr.mxu0 0.0
    %1437 = vmatpush1.msra.mxu0 0.0
    %1438 = vmatprep.subr.mxu0 0.0
    %1439 = vmatpush1.msra.mxu0 0.0
    %1440 = vmatprep.subr.mxu0 0.0
    %1441 = vmatpush1.msra.mxu0 0.0
    %1442 = vmatprep.subr.mxu0 0.0
    %1443 = vmatpush1.msra.mxu0 0.0
    %1444 = vmatprep.subr.mxu0 0.0
    %1445 = vmatpush1.msra.mxu0 0.0
    %1446 = vmatprep.subr.mxu0 0.0
    %1447 = vmatpush1.msra.mxu0 0.0
    %1448 = vmatprep.subr.mxu0 0.0
    %1449 = vmatpush1.msra.mxu0 0.0
    %1450 = vmatprep.subr.mxu0 0.0
    %1451 = vmatpush1.msra.mxu0 0.0
    %1452 = vmatprep.subr.mxu0 0.0
    %1453 = vmatpush1.msra.mxu0 0.0
    %1454 = vmatprep.subr.mxu0 0.0
    %1455 = vmatpush1.msra.mxu0 0.0
    %1456 = vmatprep.subr.mxu0 0.0
    %1457 = vmatpush1.msra.mxu0 0.0
    %1458 = vmatprep.subr.mxu0 0.0
    %1459 = vmatpush1.msra.mxu0 0.0
    %1460 = vmatprep.subr.mxu0 0.0
    %1461 = vmatpush1.msra.mxu0 0.0
    %1462 = vmatprep.subr.mxu0 0.0
    %1463 = vmatpush1.msra.mxu0 0.0
    %1464 = vmatprep.subr.mxu0 0.0
    %1465 = vmatpush1.msra.mxu0 0.0
    %1466 = vmatprep.subr.mxu0 0.0
    %1467 = vmatpush1.msra.mxu0 0.0
    %1468 = vmatprep.subr.mxu0 0.0
    %1469 = vmatpush1.msra.mxu0 0.0
    %1470 = vmatprep.subr.mxu0 0.0
    %1471 = vmatpush1.msra.mxu0 0.0
    %1472 = vmatprep.subr.mxu0 0.0
    %1473 = vmatpush1.msra.mxu0 0.0
    %1474 = vmatprep.subr.mxu0 0.0
    %1475 = vmatpush1.msra.mxu0 0.0
    %1476 = vmatprep.subr.mxu0 0.0
    %1477 = vmatpush1.msra.mxu0 0.0
    %1478 = vmatprep.subr.mxu0 0.0
    %1479 = vmatpush1.msra.mxu0 0.0
    %1480 = vmatprep.subr.mxu0 0.0
    %1481 = vmatpush1.msra.mxu0 0.0
    %1482 = vmatprep.subr.mxu0 0.0
    %1483 = vmatpush1.msra.mxu0 0.0
    %1484 = vmatprep.subr.mxu0 0.0
    %1485 = vmatpush1.msra.mxu0 0.0
    %1486 = vmatprep.subr.mxu0 0.0
    %1487 = vmatpush1.msra.mxu0 0.0
    %1488 = vmatprep.mubr.f32.mxu0 0.0
    %1489 = vmatmul.mubr.f32.gmra.mrb[0].mxu0 %v1339
    %v1490 = vpop.f32.mrb[0].mxu0
    %v1491 = vadd.f32 0.0, %v1490
    %v1492 = vpop.f32.mrb[0].mxu0
    %v1493 = vadd.f32 0.0, %v1492
    %1494 = vdwg.mxu0
    %v1495 = vadd.f32 %v1312, %v1420
    %v1496 = vadd.f32 %v1313, %v1422
    %v1497 = vadd.f32 %v1314, %v1491
    %v1498 = vadd.f32 %v1315, %v1493
    %1499 = vrot.lane.b32.xlu0 %v193, 112
    %v1500 = vpop.permute.xlu0 %1499
    %1501 = vrot.lane.b32.xlu0 %v194, 112
    %v1502 = vpop.permute.xlu0 %1501
    %1503 = vrot.lane.b32.xlu0 %v195, 112
    %v1504 = vpop.permute.xlu0 %1503
    %1505 = vrot.lane.b32.xlu0 %v196, 112
    %v1506 = vpop.permute.xlu0 %1505
    %vm1507 = vcmp.lt.s32.totalorder %v198, 112
    %v1508 = vsel %vm1507, %v1504, %v1506
    %v1509 = vsel %vm1507, %v1502, %v1504
    %v1510 = vsel %vm1507, %v1500, %v1502
    %v1511 = vsel %vm1507, %v1506, %v1500
    %v1512 = vmul.f32 %v1510, %v254
    %v1513 = vmul.f32 %v1509, %v255
    %v1514 = vmul.f32 %v1508, %v256
    %v1515 = vmul.f32 %v1511, %v257
    %1516 = vrot.lane.b32.xlu0 %v35, 100
    %v1517 = vpop.permute.xlu0 %1516
    %v1518 = vsel %vm299, %v1517, 0
    %v1521 = vsel %vm302, %v1512, 0
    %v1524 = vsel %vm302, %v1513, 0
    %v1527 = vsel %vm302, %v1514, 0
    %v1530 = vsel %vm302, %v1515, 0
    %1532 = vmatprep.subr.mxu0 %v1524
    %1533 = vmatpush1.msra.mxu0 %v1521
    %1534 = vmatprep.subr.mxu0 0.0
    %1535 = vmatpush1.msra.mxu0 0.0
    %1536 = vmatprep.subr.mxu0 0.0
    %1537 = vmatpush1.msra.mxu0 0.0
    %1538 = vmatprep.subr.mxu0 0.0
    %1539 = vmatpush1.msra.mxu0 0.0
    %1540 = vmatprep.subr.mxu0 0.0
    %1541 = vmatpush1.msra.mxu0 0.0
    %1542 = vmatprep.subr.mxu0 0.0
    %1543 = vmatpush1.msra.mxu0 0.0
    %1544 = vmatprep.subr.mxu0 0.0
    %1545 = vmatpush1.msra.mxu0 0.0
    %1546 = vmatprep.subr.mxu0 0.0
    %1547 = vmatpush1.msra.mxu0 0.0
    %1548 = vmatprep.subr.mxu0 0.0
    %1549 = vmatpush1.msra.mxu0 0.0
    %1550 = vmatprep.subr.mxu0 0.0
    %1551 = vmatpush1.msra.mxu0 0.0
    %1552 = vmatprep.subr.mxu0 0.0
    %1553 = vmatpush1.msra.mxu0 0.0
    %1554 = vmatprep.subr.mxu0 0.0
    %1555 = vmatpush1.msra.mxu0 0.0
    %1556 = vmatprep.subr.mxu0 0.0
    %1557 = vmatpush1.msra.mxu0 0.0
    %1558 = vmatprep.subr.mxu0 0.0
    %1559 = vmatpush1.msra.mxu0 0.0
    %1560 = vmatprep.subr.mxu0 0.0
    %1561 = vmatpush1.msra.mxu0 0.0
    %1562 = vmatprep.subr.mxu0 0.0
    %1563 = vmatpush1.msra.mxu0 0.0
    %1564 = vmatprep.subr.mxu0 0.0
    %1565 = vmatpush1.msra.mxu0 0.0
    %1566 = vmatprep.subr.mxu0 0.0
    %1567 = vmatpush1.msra.mxu0 0.0
    %1568 = vmatprep.subr.mxu0 0.0
    %1569 = vmatpush1.msra.mxu0 0.0
    %1570 = vmatprep.subr.mxu0 0.0
    %1571 = vmatpush1.msra.mxu0 0.0
    %1572 = vmatprep.subr.mxu0 0.0
    %1573 = vmatpush1.msra.mxu0 0.0
    %1574 = vmatprep.subr.mxu0 0.0
    %1575 = vmatpush1.msra.mxu0 0.0
    %1576 = vmatprep.subr.mxu0 0.0
    %1577 = vmatpush1.msra.mxu0 0.0
    %1578 = vmatprep.subr.mxu0 0.0
    %1579 = vmatpush1.msra.mxu0 0.0
    %1580 = vmatprep.subr.mxu0 0.0
    %1581 = vmatpush1.msra.mxu0 0.0
    %1582 = vmatprep.subr.mxu0 0.0
    %1583 = vmatpush1.msra.mxu0 0.0
    %1584 = vmatprep.subr.mxu0 0.0
    %1585 = vmatpush1.msra.mxu0 0.0
    %1586 = vmatprep.subr.mxu0 0.0
    %1587 = vmatpush1.msra.mxu0 0.0
    %1588 = vmatprep.subr.mxu0 0.0
    %1589 = vmatpush1.msra.mxu0 0.0
    %1590 = vmatprep.subr.mxu0 0.0
    %1591 = vmatpush1.msra.mxu0 0.0
    %1592 = vmatprep.subr.mxu0 0.0
    %1593 = vmatpush1.msra.mxu0 0.0
    %1594 = vmatprep.subr.mxu0 0.0
    %1595 = vmatpush1.msra.mxu0 0.0
    %1596 = vmatprep.mubr.f32.mxu0 0.0
    %1597 = vmatmul.mubr.f32.gmra.mrb[0].mxu0 %v1518
    %v1598 = vpop.f32.mrb[0].mxu0
    %v1599 = vadd.f32 0.0, %v1598
    %v1600 = vpop.f32.mrb[0].mxu0
    %v1601 = vadd.f32 0.0, %v1600
    %1602 = vdwg.mxu0
    %1603 = vmatprep.subr.mxu0 %v1530
    %1604 = vmatpush1.msra.mxu0 %v1527
    %1605 = vmatprep.subr.mxu0 0.0
    %1606 = vmatpush1.msra.mxu0 0.0
    %1607 = vmatprep.subr.mxu0 0.0
    %1608 = vmatpush1.msra.mxu0 0.0
    %1609 = vmatprep.subr.mxu0 0.0
    %1610 = vmatpush1.msra.mxu0 0.0
    %1611 = vmatprep.subr.mxu0 0.0
    %1612 = vmatpush1.msra.mxu0 0.0
    %1613 = vmatprep.subr.mxu0 0.0
    %1614 = vmatpush1.msra.mxu0 0.0
    %1615 = vmatprep.subr.mxu0 0.0
    %1616 = vmatpush1.msra.mxu0 0.0
    %1617 = vmatprep.subr.mxu0 0.0
    %1618 = vmatpush1.msra.mxu0 0.0
    %1619 = vmatprep.subr.mxu0 0.0
    %1620 = vmatpush1.msra.mxu0 0.0
    %1621 = vmatprep.subr.mxu0 0.0
    %1622 = vmatpush1.msra.mxu0 0.0
    %1623 = vmatprep.subr.mxu0 0.0
    %1624 = vmatpush1.msra.mxu0 0.0
    %1625 = vmatprep.subr.mxu0 0.0
    %1626 = vmatpush1.msra.mxu0 0.0
    %1627 = vmatprep.subr.mxu0 0.0
    %1628 = vmatpush1.msra.mxu0 0.0
    %1629 = vmatprep.subr.mxu0 0.0
    %1630 = vmatpush1.msra.mxu0 0.0
    %1631 = vmatprep.subr.mxu0 0.0
    %1632 = vmatpush1.msra.mxu0 0.0
    %1633 = vmatprep.subr.mxu0 0.0
    %1634 = vmatpush1.msra.mxu0 0.0
    %1635 = vmatprep.subr.mxu0 0.0
    %1636 = vmatpush1.msra.mxu0 0.0
    %1637 = vmatprep.subr.mxu0 0.0
    %1638 = vmatpush1.msra.mxu0 0.0
    %1639 = vmatprep.subr.mxu0 0.0
    %1640 = vmatpush1.msra.mxu0 0.0
    %1641 = vmatprep.subr.mxu0 0.0
    %1642 = vmatpush1.msra.mxu0 0.0
    %1643 = vmatprep.subr.mxu0 0.0
    %1644 = vmatpush1.msra.mxu0 0.0
    %1645 = vmatprep.subr.mxu0 0.0
    %1646 = vmatpush1.msra.mxu0 0.0
    %1647 = vmatprep.subr.mxu0 0.0
    %1648 = vmatpush1.msra.mxu0 0.0
    %1649 = vmatprep.subr.mxu0 0.0
    %1650 = vmatpush1.msra.mxu0 0.0
    %1651 = vmatprep.subr.mxu0 0.0
    %1652 = vmatpush1.msra.mxu0 0.0
    %1653 = vmatprep.subr.mxu0 0.0
    %1654 = vmatpush1.msra.mxu0 0.0
    %1655 = vmatprep.subr.mxu0 0.0
    %1656 = vmatpush1.msra.mxu0 0.0
    %1657 = vmatprep.subr.mxu0 0.0
    %1658 = vmatpush1.msra.mxu0 0.0
    %1659 = vmatprep.subr.mxu0 0.0
    %1660 = vmatpush1.msra.mxu0 0.0
    %1661 = vmatprep.subr.mxu0 0.0
    %1662 = vmatpush1.msra.mxu0 0.0
    %1663 = vmatprep.subr.mxu0 0.0
    %1664 = vmatpush1.msra.mxu0 0.0
    %1665 = vmatprep.subr.mxu0 0.0
    %1666 = vmatpush1.msra.mxu0 0.0
    %1667 = vmatprep.mubr.f32.mxu0 0.0
    %1668 = vmatmul.mubr.f32.gmra.mrb[0].mxu0 %v1518
    %v1669 = vpop.f32.mrb[0].mxu0
    %v1670 = vadd.f32 0.0, %v1669
    %v1671 = vpop.f32.mrb[0].mxu0
    %v1672 = vadd.f32 0.0, %v1671
    %1673 = vdwg.mxu0
    %v1674 = vadd.f32 %v1495, %v1599
    %v1675 = vadd.f32 %v1496, %v1601
    %v1676 = vadd.f32 %v1497, %v1670
    %v1677 = vadd.f32 %v1498, %v1672
    %1678 = vrot.lane.b32.xlu0 %v193, 111
    %v1679 = vpop.permute.xlu0 %1678
    %1680 = vrot.lane.b32.xlu0 %v194, 111
    %v1681 = vpop.permute.xlu0 %1680
    %1682 = vrot.lane.b32.xlu0 %v195, 111
    %v1683 = vpop.permute.xlu0 %1682
    %1684 = vrot.lane.b32.xlu0 %v196, 111
    %v1685 = vpop.permute.xlu0 %1684
    %vm1686 = vcmp.lt.s32.totalorder %v198, 111
    %v1687 = vsel %vm1686, %v1683, %v1685
    %v1688 = vsel %vm1686, %v1681, %v1683
    %v1689 = vsel %vm1686, %v1679, %v1681
    %v1690 = vsel %vm1686, %v1685, %v1679
    %v1691 = vmul.f32 %v1689, %v230
    %v1692 = vmul.f32 %v1688, %v231
    %v1693 = vmul.f32 %v1687, %v232
    %v1694 = vmul.f32 %v1690, %v233
    %v1695 = vmul.f32 %v1691, %v254
    %v1696 = vmul.f32 %v1692, %v255
    %v1697 = vmul.f32 %v1693, %v256
    %v1698 = vmul.f32 %v1694, %v257
    %1699 = vrot.lane.b32.xlu0 %v35, 96
    %v1700 = vpop.permute.xlu0 %1699
    %v1701 = vsel %vm299, %v1700, 0
    %v1704 = vsel %vm302, %v1695, 0
    %v1707 = vsel %vm302, %v1696, 0
    %v1710 = vsel %vm302, %v1697, 0
    %v1713 = vsel %vm302, %v1698, 0
    %1715 = vmatprep.subr.mxu0 %v1707
    %1716 = vmatpush1.msra.mxu0 %v1704
    %1717 = vmatprep.subr.mxu0 0.0
    %1718 = vmatpush1.msra.mxu0 0.0
    %1719 = vmatprep.subr.mxu0 0.0
    %1720 = vmatpush1.msra.mxu0 0.0
    %1721 = vmatprep.subr.mxu0 0.0
    %1722 = vmatpush1.msra.mxu0 0.0
    %1723 = vmatprep.subr.mxu0 0.0
    %1724 = vmatpush1.msra.mxu0 0.0
    %1725 = vmatprep.subr.mxu0 0.0
    %1726 = vmatpush1.msra.mxu0 0.0
    %1727 = vmatprep.subr.mxu0 0.0
    %1728 = vmatpush1.msra.mxu0 0.0
    %1729 = vmatprep.subr.mxu0 0.0
    %1730 = vmatpush1.msra.mxu0 0.0
    %1731 = vmatprep.subr.mxu0 0.0
    %1732 = vmatpush1.msra.mxu0 0.0
    %1733 = vmatprep.subr.mxu0 0.0
    %1734 = vmatpush1.msra.mxu0 0.0
    %1735 = vmatprep.subr.mxu0 0.0
    %1736 = vmatpush1.msra.mxu0 0.0
    %1737 = vmatprep.subr.mxu0 0.0
    %1738 = vmatpush1.msra.mxu0 0.0
    %1739 = vmatprep.subr.mxu0 0.0
    %1740 = vmatpush1.msra.mxu0 0.0
    %1741 = vmatprep.subr.mxu0 0.0
    %1742 = vmatpush1.msra.mxu0 0.0
    %1743 = vmatprep.subr.mxu0 0.0
    %1744 = vmatpush1.msra.mxu0 0.0
    %1745 = vmatprep.subr.mxu0 0.0
    %1746 = vmatpush1.msra.mxu0 0.0
    %1747 = vmatprep.subr.mxu0 0.0
    %1748 = vmatpush1.msra.mxu0 0.0
    %1749 = vmatprep.subr.mxu0 0.0
    %1750 = vmatpush1.msra.mxu0 0.0
    %1751 = vmatprep.subr.mxu0 0.0
    %1752 = vmatpush1.msra.mxu0 0.0
    %1753 = vmatprep.subr.mxu0 0.0
    %1754 = vmatpush1.msra.mxu0 0.0
    %1755 = vmatprep.subr.mxu0 0.0
    %1756 = vmatpush1.msra.mxu0 0.0
    %1757 = vmatprep.subr.mxu0 0.0
    %1758 = vmatpush1.msra.mxu0 0.0
    %1759 = vmatprep.subr.mxu0 0.0
    %1760 = vmatpush1.msra.mxu0 0.0
    %1761 = vmatprep.subr.mxu0 0.0
    %1762 = vmatpush1.msra.mxu0 0.0
    %1763 = vmatprep.subr.mxu0 0.0
    %1764 = vmatpush1.msra.mxu0 0.0
    %1765 = vmatprep.subr.mxu0 0.0
    %1766 = vmatpush1.msra.mxu0 0.0
    %1767 = vmatprep.subr.mxu0 0.0
    %1768 = vmatpush1.msra.mxu0 0.0
    %1769 = vmatprep.subr.mxu0 0.0
    %1770 = vmatpush1.msra.mxu0 0.0
    %1771 = vmatprep.subr.mxu0 0.0
    %1772 = vmatpush1.msra.mxu0 0.0
    %1773 = vmatprep.subr.mxu0 0.0
    %1774 = vmatpush1.msra.mxu0 0.0
    %1775 = vmatprep.subr.mxu0 0.0
    %1776 = vmatpush1.msra.mxu0 0.0
    %1777 = vmatprep.subr.mxu0 0.0
    %1778 = vmatpush1.msra.mxu0 0.0
    %1779 = vmatprep.mubr.f32.mxu0 0.0
    %1780 = vmatmul.mubr.f32.gmra.mrb[0].mxu0 %v1701
    %v1781 = vpop.f32.mrb[0].mxu0
    %v1782 = vadd.f32 0.0, %v1781
    %v1783 = vpop.f32.mrb[0].mxu0
    %v1784 = vadd.f32 0.0, %v1783
    %1785 = vdwg.mxu0
    %1786 = vmatprep.subr.mxu0 %v1713
    %1787 = vmatpush1.msra.mxu0 %v1710
    %1788 = vmatprep.subr.mxu0 0.0
    %1789 = vmatpush1.msra.mxu0 0.0
    %1790 = vmatprep.subr.mxu0 0.0
    %1791 = vmatpush1.msra.mxu0 0.0
    %1792 = vmatprep.subr.mxu0 0.0
    %1793 = vmatpush1.msra.mxu0 0.0
    %1794 = vmatprep.subr.mxu0 0.0
    %1795 = vmatpush1.msra.mxu0 0.0
    %1796 = vmatprep.subr.mxu0 0.0
    %1797 = vmatpush1.msra.mxu0 0.0
    %1798 = vmatprep.subr.mxu0 0.0
    %1799 = vmatpush1.msra.mxu0 0.0
    %1800 = vmatprep.subr.mxu0 0.0
    %1801 = vmatpush1.msra.mxu0 0.0
    %1802 = vmatprep.subr.mxu0 0.0
    %1803 = vmatpush1.msra.mxu0 0.0
    %1804 = vmatprep.subr.mxu0 0.0
    %1805 = vmatpush1.msra.mxu0 0.0
    %1806 = vmatprep.subr.mxu0 0.0
    %1807 = vmatpush1.msra.mxu0 0.0
    %1808 = vmatprep.subr.mxu0 0.0
    %1809 = vmatpush1.msra.mxu0 0.0
    %1810 = vmatprep.subr.mxu0 0.0
    %1811 = vmatpush1.msra.mxu0 0.0
    %1812 = vmatprep.subr.mxu0 0.0
    %1813 = vmatpush1.msra.mxu0 0.0
    %1814 = vmatprep.subr.mxu0 0.0
    %1815 = vmatpush1.msra.mxu0 0.0
    %1816 = vmatprep.subr.mxu0 0.0
    %1817 = vmatpush1.msra.mxu0 0.0
    %1818 = vmatprep.subr.mxu0 0.0
    %1819 = vmatpush1.msra.mxu0 0.0
    %1820 = vmatprep.subr.mxu0 0.0
    %1821 = vmatpush1.msra.mxu0 0.0
    %1822 = vmatprep.subr.mxu0 0.0
    %1823 = vmatpush1.msra.mxu0 0.0
    %1824 = vmatprep.subr.mxu0 0.0
    %1825 = vmatpush1.msra.mxu0 0.0
    %1826 = vmatprep.subr.mxu0 0.0
    %1827 = vmatpush1.msra.mxu0 0.0
    %1828 = vmatprep.subr.mxu0 0.0
    %1829 = vmatpush1.msra.mxu0 0.0
    %1830 = vmatprep.subr.mxu0 0.0
    %1831 = vmatpush1.msra.mxu0 0.0
    %1832 = vmatprep.subr.mxu0 0.0
    %1833 = vmatpush1.msra.mxu0 0.0
    %1834 = vmatprep.subr.mxu0 0.0
    %1835 = vmatpush1.msra.mxu0 0.0
    %1836 = vmatprep.subr.mxu0 0.0
    %1837 = vmatpush1.msra.mxu0 0.0
    %1838 = vmatprep.subr.mxu0 0.0
    %1839 = vmatpush1.msra.mxu0 0.0
    %1840 = vmatprep.subr.mxu0 0.0
    %1841 = vmatpush1.msra.mxu0 0.0
    %1842 = vmatprep.subr.mxu0 0.0
    %1843 = vmatpush1.msra.mxu0 0.0
    %1844 = vmatprep.subr.mxu0 0.0
    %1845 = vmatpush1.msra.mxu0 0.0
    %1846 = vmatprep.subr.mxu0 0.0
    %1847 = vmatpush1.msra.mxu0 0.0
    %1848 = vmatprep.subr.mxu0 0.0
    %1849 = vmatpush1.msra.mxu0 0.0
    %1850 = vmatprep.mubr.f32.mxu0 0.0
    %1851 = vmatmul.mubr.f32.gmra.mrb[0].mxu0 %v1701
    %v1852 = vpop.f32.mrb[0].mxu0
    %v1853 = vadd.f32 0.0, %v1852
    %v1854 = vpop.f32.mrb[0].mxu0
    %v1855 = vadd.f32 0.0, %v1854
    %1856 = vdwg.mxu0
    %v1857 = vadd.f32 %v1674, %v1782
    %v1858 = vadd.f32 %v1675, %v1784
    %v1859 = vadd.f32 %v1676, %v1853
    %v1860 = vadd.f32 %v1677, %v1855
    %1862 = vset.pattern.permute.xlu0 0
    %1863 = vperm.xlu0 %1862, %v36
    %v1864 = vpop.permute.xlu0 %1863
    %v1866 = vadd.f32 %v1857, %v1864
    %v1867 = vadd.f32 %v1858, %v1864
    %v1868 = vadd.f32 %v1859, %v1864
    %v1869 = vadd.f32 %v1860, %v1864
    %v1870 = vmul.f32 %v1866, 0.1
    %v1871 = vmul.f32 %v1867, 0.1
    %v1872 = vmul.f32 %v1868, 0.1
    %v1873 = vmul.f32 %v1869, 0.1
    %v1874 = vmax.f32 %v1866, %v1870
    %v1875 = vmax.f32 %v1867, %v1871
    %v1876 = vmax.f32 %v1868, %v1872
    %v1877 = vmax.f32 %v1869, %v1873
    %v1878 = vadd.f32 %v30, %v1874
    %v1879 = vadd.f32 %v31, %v1875
    %v1880 = vadd.f32 %v32, %v1876
    %v1881 = vadd.f32 %v33, %v1877
    %1882 = vst [vmem:[#allocation5] sm:$0xff] %v1878
    %1883 = vst [vmem:[#allocation5 + $0x8] sm:$0xff] %v1879
    %1884 = vst [vmem:[#allocation5 + $0x10] sm:$0xff] %v1880
    %1885 = vst [vmem:[#allocation5 + $0x18] sm:$0xff] %v1881
    // Predicated region
    $region22: #{tpu_custom_call.1} parent=1 // pred_check
      _
    $region23: #{tpu_custom_call.1} parent=1 // pred_check_branch
      %1887 = sbr.rel (0) target = $region25
    $region24: #{tpu_custom_call.1} parent=1 // pred_region
      %s1889 = ssub.s32 512, 512
      %1890 = vsyncadd [#allocation4], %s1889
      %s1892 = sshll.u32 [#allocation5], 4
      %s1893 = int_to_ptr.vmem [resolvable:$true] %s1892
      %1895 = dma.vmem_to_hbm [thread:$0]  %s1893, 512, %s4, [#allocation4]
    $region25: #{tpu_custom_call.1} parent=1 // pred_fallthru
      _
    // Predicated region
    $region26: #{tpu_custom_call.1} parent=1 // pred_check
      _
    $region27: #{tpu_custom_call.1} parent=1 // pred_check_branch
      %1897 = sbr.rel (0) target = $region29
    $region28: #{tpu_custom_call.1} parent=1 // pred_region
      %1898 = dma.done [#allocation4], 512
    $region29: #{tpu_custom_call.1} parent=1 // pred_fallthru
      _
    %1899 = vsyncpa [#allocation3], 1
    %1900 = vsyncpa [#allocation4], 1

</llo_original>
